<compile_context>
chip_gen: v6e
topology: v6e:2x2x1
jax: 0.10.0
libtpu: 0.0.40
codegen_flags: <defaults>
</compile_context>

<pallas_src>
import functools
import math

import jax
import jax.numpy as jnp
from jax.experimental import pallas as pl
from jax.experimental.pallas import tpu as pltpu


# -----------------------------------------------------------------------------
# Pallas kernel: `batch_tile` batch elements per grid step
# -----------------------------------------------------------------------------
def _ortho_cross_attn_kernel(
    q_ref,      # (Bt, Lq, D) f32   query tokens
    k_ref,      # (Bt, S,  D) f32   key tokens
    v_ref,      # (Bt, S,  D) f32   value tokens
    mask_ref,   # (nh, 1, D)  f32   head-selection mask (1 where lane d in head h)
    wq_ref, bq_ref,   # (D, D), (1, D)   (attention scale pre-folded into Wq/bq)
    wk_ref, bk_ref,
    wv_ref, bv_ref,
    wo_ref, bo_ref,
    out_ref,    # (Bt, Lq, D)      f32
    attn_ref,   # (Bt, S, nh*Lq)   f32  lane-dense transposed attention weights
    *, num_heads, q_len, kv_len, dim, batch_tile,
):
    f32 = jnp.float32

    # Fused projections over all Bt batch elements at once (fills MXU M dim).
    q = q_ref[...].reshape(batch_tile * q_len, dim)
    k = k_ref[...].reshape(batch_tile * kv_len, dim)
    v = v_ref[...].reshape(batch_tile * kv_len, dim)

    Q = jnp.dot(q, wq_ref[...], preferred_element_type=f32) + bq_ref[...]  # (Bt*Lq, D)
    K = jnp.dot(k, wk_ref[...], preferred_element_type=f32) + bk_ref[...]  # (Bt*S,  D)
    V = jnp.dot(v, wv_ref[...], preferred_element_type=f32) + bv_ref[...]  # (Bt*S,  D)

    mask = mask_ref[...]                                   # (nh, 1, D)

    # Per-batch attention (scores are block-diagonal over batch): short static
    # loop over Bt; the heavy matmuls above/below stay fused over the batch.
    ctx_rows = []
    for b in range(batch_tile):
        Qb = Q[b * q_len:(b + 1) * q_len, :]               # (Lq, D)
        Kb = K[b * kv_len:(b + 1) * kv_len, :]             # (S,  D)
        Vb = V[b * kv_len:(b + 1) * kv_len, :]             # (S,  D)

        # Head-batched scores without lane slicing:
        #   Qm[h*Lq+q, d] = Qb[q, d] * 1[d in head h]   -> lane-dense, full D.
        Qm = (Qb[None, :, :] * mask).reshape(num_heads * q_len, dim)
        scores = jnp.einsum("nd,sd->ns", Qm, Kb,
                            preferred_element_type=f32)    # (nh*Lq, S)

        # Numerically-stable softmax with EXACT normalization (attn rows must
        # sum to 1; the approx reciprocal was outside the 2e-3 tolerance).
        m = jnp.max(scores, axis=-1, keepdims=True)
        e = jnp.exp(scores - m)
        p = e / jnp.sum(e, axis=-1, keepdims=True)         # (nh*Lq, S)
        # TODO(synk): attn_drop (Dropout) omitted — eval-mode identity.

        # Lane-dense store: last dim nh*Lq (128 here) instead of S (8).
        attn_ref[b] = p.T                                  # (S, nh*Lq)

        # Weighted sum for all heads in one matmul + block-diagonal extraction.
        pv = jnp.dot(p, Vb, preferred_element_type=f32)    # (nh*Lq, D)
        ctx_rows.append(
            jnp.sum(pv.reshape(num_heads, q_len, dim) * mask, axis=0))  # (Lq, D)

    ctx = jnp.concatenate(ctx_rows, axis=0)                # (Bt*Lq, D)
    out = jnp.dot(ctx, wo_ref[...], preferred_element_type=f32) + bo_ref[...]
    out_ref[...] = out.reshape(batch_tile, q_len, dim).astype(out_ref.dtype)


# -----------------------------------------------------------------------------
# Wrapper reproducing OrthogonalCrossAttention.forward (key_padding_mask=None)
# -----------------------------------------------------------------------------
def _pick_batch_tile(batch, q_len):
    """~128 fused rows per step while keeping >= 2 grid steps (v7x: 2 TCs)."""
    bt = max(1, min(batch, 128 // max(q_len, 1)))
    if batch >= 2:
        bt = max(1, min(bt, batch // 2))
    while batch % bt:
        bt -= 1
    return bt


def orthogonal_cross_attention(query, key, value, params, *, num_heads,
                               batch_tile=None):
    """query (B,Lq,D), key/value (B,S,D); weights stored (in,out) = torch weight.T.

    Returns (out (B,Lq,D) f32, attn (B,nh,Lq,S) f32).
    """
    # TODO(synk): key_padding_mask path not implemented (None-only, default call).
    B, Lq, D = query.shape
    S = key.shape[1]
    nh = num_heads
    head_dim = D // nh
    scale = 1.0 / math.sqrt(head_dim)
    f32 = jnp.float32

    bt = _pick_batch_tile(B, Lq) if batch_tile is None else batch_tile
    assert B % bt == 0, (B, bt)

    # Fold the attention scale into the Q projection (no per-score multiply).
    wq = (params["wq"] * scale).astype(f32)
    bq = (params["bq"] * scale).astype(f32)
    wk = params["wk"].astype(f32)
    bk = params["bk"].astype(f32)
    wv = params["wv"].astype(f32)
    bv = params["bv"].astype(f32)
    wo = params["wo"].astype(f32)
    bo = params["bo"].astype(f32)

    # Head-selection mask: (nh, 1, D), 1.0 where lane d belongs to head h.
    # TODO(synk): at realistic head_dim (>=128) switch to a per-head einsum;
    # the mask trick is only right for tiny head_dim like here.
    head_mask = (jnp.arange(D, dtype=jnp.int32)[None, :] // head_dim
                 == jnp.arange(nh, dtype=jnp.int32)[:, None]).astype(f32)[:, None, :]

    kernel = functools.partial(
        _ortho_cross_attn_kernel,
        num_heads=nh, q_len=Lq, kv_len=S, dim=D, batch_tile=bt)

    def _full(arr):
        n = arr.ndim
        return pl.BlockSpec(arr.shape, lambda g, _n=n: (0,) * _n)

    grid_spec = pltpu.PrefetchScalarGridSpec(
        num_scalar_prefetch=0,
        grid=(B // bt,),
        in_specs=[
            pl.BlockSpec((bt, Lq, D), lambda g: (g, 0, 0)),   # query
            pl.BlockSpec((bt, S, D), lambda g: (g, 0, 0)),    # key
            pl.BlockSpec((bt, S, D), lambda g: (g, 0, 0)),    # value
            _full(head_mask),
            # TODO(synk): for large D on v7x mark the weight specs
            # single-buffered (pipeline_mode=pl.Buffered(1)) and tile Lq/S;
            # irrelevant at D=32, Lq=16, S=8.
            _full(wq), _full(bq),
            _full(wk), _full(bk),
            _full(wv), _full(bv),
            _full(wo), _full(bo),
        ],
        out_specs=(
            pl.BlockSpec((bt, Lq, D), lambda g: (g, 0, 0)),        # out
            pl.BlockSpec((bt, S, nh * Lq), lambda g: (g, 0, 0)),   # attn^T (lane-dense)
        ),
    )

    out, attn_t = pl.pallas_call(
        kernel,
        out_shape=(jax.ShapeDtypeStruct((B, Lq, D), f32),
                   jax.ShapeDtypeStruct((B, S, nh * Lq), f32)),
        grid_spec=grid_spec,
        compiler_params=pltpu.CompilerParams(
            dimension_semantics=("parallel",)),
    )(query.astype(f32), key.astype(f32), value.astype(f32), head_mask,
      wq, bq, wk, bk, wv, bv, wo, bo)

    # Undo the lane-dense transposed layout outside the kernel (cheap XLA op).
    attn = attn_t.reshape(B, S, nh, Lq).transpose(0, 2, 3, 1)   # (B, nh, Lq, S)
    return out, attn


# -----------------------------------------------------------------------------
# Pure-JAX reference (mirrors the PyTorch forward, eval-mode dropout)
# -----------------------------------------------------------------------------
def _reference(query, key, value, params, num_heads):
    hp = jax.lax.Precision.HIGHEST
    B, Lq, D = query.shape
    S = key.shape[1]
    hd = D // num_heads
    scale = hd ** (-0.5)
    Q = jnp.einsum("bld,de->ble", query, params["wq"], precision=hp) + params["bq"]
    K = jnp.einsum("bld,de->ble", key, params["wk"], precision=hp) + params["bk"]
    V = jnp.einsum("bld,de->ble", value, params["wv"], precision=hp) + params["bv"]
    Q = Q.reshape(B, Lq, num_heads, hd).transpose(0, 2, 1, 3)
    K = K.reshape(B, S, num_heads, hd).transpose(0, 2, 1, 3)
    V = V.reshape(B, S, num_heads, hd).transpose(0, 2, 1, 3)
    attn = jax.nn.softmax(
        jnp.einsum("bhqd,bhkd->bhqk", Q, K, precision=hp) * scale, axis=-1)
    out = jnp.einsum("bhqk,bhkd->bhqd", attn, V, precision=hp)
    out = out.transpose(0, 2, 1, 3).reshape(B, Lq, D)
    out = jnp.einsum("bld,de->ble", out, params["wo"], precision=hp) + params["bo"]
    return out, attn


# -----------------------------------------------------------------------------
# Main
# -----------------------------------------------------------------------------
if __name__ == "__main__":
    B, Lq, S = 4, 16, 8          # batch, query seq, key/value seq
    dim, num_heads = 32, 8       # head_dim = 4

    key0 = jax.random.PRNGKey(0)
    ks = jax.random.split(key0, 11)
    ortho = jax.nn.initializers.orthogonal()

    # Weights stored as (in, out) == PyTorch weight.T; orthogonal like the
    # parametrized nn.Linear layers in the module.
    params = {
        "wq": ortho(ks[0], (dim, dim), jnp.float32),
        "bq": 0.1 * jax.random.normal(ks[1], (1, dim), jnp.float32),
        "wk": ortho(ks[2], (dim, dim), jnp.float32),
        "bk": 0.1 * jax.random.normal(ks[3], (1, dim), jnp.float32),
        "wv": ortho(ks[4], (dim, dim), jnp.float32),
        "bv": 0.1 * jax.random.normal(ks[5], (1, dim), jnp.float32),
        "wo": ortho(ks[6], (dim, dim), jnp.float32),
        "bo": 0.1 * jax.random.normal(ks[7], (1, dim), jnp.float32),
    }

    query = jax.random.normal(ks[8], (B, Lq, dim), jnp.float32)
    key_in = jax.random.normal(ks[9], (B, S, dim), jnp.float32)
    value = jax.random.normal(ks[10], (B, S, dim), jnp.float32)

    ref_out, ref_attn = _reference(query, key_in, value, params, num_heads)

    # Default: batch_tile=2 -> grid=(2,), fused 32-row projections per step.
    out, attn = jax.block_until_ready(
        orthogonal_cross_attention(query, key_in, value, params,
                                   num_heads=num_heads))
    assert out.shape == (B, Lq, dim)
    assert attn.shape == (B, num_heads, Lq, S)
    assert jnp.allclose(out, ref_out, atol=2e-3, rtol=2e-3), \
        float(jnp.max(jnp.abs(out - ref_out)))
    assert jnp.allclose(attn, ref_attn, atol=2e-3, rtol=2e-3), \
        float(jnp.max(jnp.abs(attn - ref_attn)))
    # Exact normalization: attention rows sum to 1.
    assert jnp.allclose(attn.sum(-1), 1.0, atol=1e-5)

    # Also exercise the non-tiled path (batch_tile=1, grid=(B,)).
    out1, attn1 = jax.block_until_ready(
        orthogonal_cross_attention(query, key_in, value, params,
                                   num_heads=num_heads, batch_tile=1))
    assert jnp.allclose(out1, ref_out, atol=2e-3, rtol=2e-3)
    assert jnp.allclose(attn1, ref_attn, atol=2e-3, rtol=2e-3)

    print("KERNEL_OK")
</pallas_src>

<mosaic_0001>
module attributes {stable_mosaic.version = 11 : i64} {
  func.func @_ortho_cross_attn_kernel(%arg0: i32, %arg1: memref<2x16x32xf32, #tpu.memory_space<vmem>>, %arg2: memref<2x8x32xf32, #tpu.memory_space<vmem>>, %arg3: memref<2x8x32xf32, #tpu.memory_space<vmem>>, %arg4: memref<8x1x32xf32, #tpu.memory_space<vmem>>, %arg5: memref<32x32xf32, #tpu.memory_space<vmem>>, %arg6: memref<1x32xf32, #tpu.memory_space<vmem>>, %arg7: memref<32x32xf32, #tpu.memory_space<vmem>>, %arg8: memref<1x32xf32, #tpu.memory_space<vmem>>, %arg9: memref<32x32xf32, #tpu.memory_space<vmem>>, %arg10: memref<1x32xf32, #tpu.memory_space<vmem>>, %arg11: memref<32x32xf32, #tpu.memory_space<vmem>>, %arg12: memref<1x32xf32, #tpu.memory_space<vmem>>, %arg13: memref<2x16x32xf32, #tpu.memory_space<vmem>>, %arg14: memref<2x8x128xf32, #tpu.memory_space<vmem>>) attributes {dimension_semantics = [#tpu.dimension_semantics<parallel>], iteration_bounds = array<i64: 2>, scalar_prefetch = 0 : i64, scratch_operands = 0 : i64, tpu.core_type = #tpu.core_type<tc>, window_params = [{transform_indices = @transform_0, window_bounds = array<i64: 2, 16, 32>}, {transform_indices = @transform_1, window_bounds = array<i64: 2, 8, 32>}, {transform_indices = @transform_2, window_bounds = array<i64: 2, 8, 32>}, {pipeline_mode = #tpu.pipeline_mode<synchronous>, transform_indices = @transform_3, window_bounds = array<i64: 8, 1, 32>}, {pipeline_mode = #tpu.pipeline_mode<synchronous>, transform_indices = @transform_4, window_bounds = array<i64: 32, 32>}, {pipeline_mode = #tpu.pipeline_mode<synchronous>, transform_indices = @transform_5, window_bounds = array<i64: 1, 32>}, {pipeline_mode = #tpu.pipeline_mode<synchronous>, transform_indices = @transform_6, window_bounds = array<i64: 32, 32>}, {pipeline_mode = #tpu.pipeline_mode<synchronous>, transform_indices = @transform_7, window_bounds = array<i64: 1, 32>}, {pipeline_mode = #tpu.pipeline_mode<synchronous>, transform_indices = @transform_8, window_bounds = array<i64: 32, 32>}, {pipeline_mode = #tpu.pipeline_mode<synchronous>, transform_indices = @transform_9, window_bounds = array<i64: 1, 32>}, {pipeline_mode = #tpu.pipeline_mode<synchronous>, transform_indices = @transform_10, window_bounds = array<i64: 32, 32>}, {pipeline_mode = #tpu.pipeline_mode<synchronous>, transform_indices = @transform_11, window_bounds = array<i64: 1, 32>}, {transform_indices = @transform_12, window_bounds = array<i64: 2, 16, 32>}, {transform_indices = @transform_13, window_bounds = array<i64: 2, 8, 128>}]} {
    %c0 = arith.constant 0 : index
    %c0_0 = arith.constant 0 : index
    %c0_1 = arith.constant 0 : index
    %0 = vector.load %arg1[%c0, %c0_0, %c0_1] : memref<2x16x32xf32, #tpu.memory_space<vmem>>, vector<2x16x32xf32>
    %1 = vector.shape_cast %0 : vector<2x16x32xf32> to vector<32x32xf32>
    %c0_2 = arith.constant 0 : index
    %c0_3 = arith.constant 0 : index
    %c0_4 = arith.constant 0 : index
    %2 = vector.load %arg2[%c0_2, %c0_3, %c0_4] : memref<2x8x32xf32, #tpu.memory_space<vmem>>, vector<2x8x32xf32>
    %3 = vector.shape_cast %2 : vector<2x8x32xf32> to vector<16x32xf32>
    %c0_5 = arith.constant 0 : index
    %c0_6 = arith.constant 0 : index
    %c0_7 = arith.constant 0 : index
    %4 = vector.load %arg3[%c0_5, %c0_6, %c0_7] : memref<2x8x32xf32, #tpu.memory_space<vmem>>, vector<2x8x32xf32>
    %5 = vector.shape_cast %4 : vector<2x8x32xf32> to vector<16x32xf32>
    %c0_8 = arith.constant 0 : index
    %c0_9 = arith.constant 0 : index
    %6 = vector.load %arg5[%c0_8, %c0_9] : memref<32x32xf32, #tpu.memory_space<vmem>>, vector<32x32xf32>
    %cst = arith.constant dense<0.000000e+00> : vector<32x32xf32>
    %7 = tpu.matmul %1, %6, %cst {dimension_numbers = #tpu.dot_dimension_numbers<[1], [0], [0], [1], [0, 0, 1, 1], [], []>} : vector<32x32xf32>, vector<32x32xf32>, vector<32x32xf32> -> vector<32x32xf32>
    %c0_10 = arith.constant 0 : index
    %c0_11 = arith.constant 0 : index
    %8 = vector.load %arg6[%c0_10, %c0_11] : memref<1x32xf32, #tpu.memory_space<vmem>>, vector<1x32xf32>
    %9 = vector.broadcast %8 : vector<1x32xf32> to vector<32x32xf32>
    %10 = arith.addf %7, %9 : vector<32x32xf32>
    %c0_12 = arith.constant 0 : index
    %c0_13 = arith.constant 0 : index
    %11 = vector.load %arg7[%c0_12, %c0_13] : memref<32x32xf32, #tpu.memory_space<vmem>>, vector<32x32xf32>
    %cst_14 = arith.constant dense<0.000000e+00> : vector<16x32xf32>
    %12 = tpu.matmul %3, %11, %cst_14 {dimension_numbers = #tpu.dot_dimension_numbers<[1], [0], [0], [1], [0, 0, 1, 1], [], []>} : vector<16x32xf32>, vector<32x32xf32>, vector<16x32xf32> -> vector<16x32xf32>
    %c0_15 = arith.constant 0 : index
    %c0_16 = arith.constant 0 : index
    %13 = vector.load %arg8[%c0_15, %c0_16] : memref<1x32xf32, #tpu.memory_space<vmem>>, vector<1x32xf32>
    %14 = vector.broadcast %13 : vector<1x32xf32> to vector<16x32xf32>
    %15 = arith.addf %12, %14 : vector<16x32xf32>
    %c0_17 = arith.constant 0 : index
    %c0_18 = arith.constant 0 : index
    %16 = vector.load %arg9[%c0_17, %c0_18] : memref<32x32xf32, #tpu.memory_space<vmem>>, vector<32x32xf32>
    %cst_19 = arith.constant dense<0.000000e+00> : vector<16x32xf32>
    %17 = tpu.matmul %5, %16, %cst_19 {dimension_numbers = #tpu.dot_dimension_numbers<[1], [0], [0], [1], [0, 0, 1, 1], [], []>} : vector<16x32xf32>, vector<32x32xf32>, vector<16x32xf32> -> vector<16x32xf32>
    %c0_20 = arith.constant 0 : index
    %c0_21 = arith.constant 0 : index
    %18 = vector.load %arg10[%c0_20, %c0_21] : memref<1x32xf32, #tpu.memory_space<vmem>>, vector<1x32xf32>
    %19 = vector.broadcast %18 : vector<1x32xf32> to vector<16x32xf32>
    %20 = arith.addf %17, %19 : vector<16x32xf32>
    %c0_22 = arith.constant 0 : index
    %c0_23 = arith.constant 0 : index
    %c0_24 = arith.constant 0 : index
    %21 = vector.load %arg4[%c0_22, %c0_23, %c0_24] : memref<8x1x32xf32, #tpu.memory_space<vmem>>, vector<8x1x32xf32>
    %22 = vector.extract_strided_slice %10 {offsets = [0, 0], sizes = [16, 32], strides = [1, 1]} : vector<32x32xf32> to vector<16x32xf32>
    %23 = vector.extract_strided_slice %15 {offsets = [0, 0], sizes = [8, 32], strides = [1, 1]} : vector<16x32xf32> to vector<8x32xf32>
    %24 = vector.extract_strided_slice %20 {offsets = [0, 0], sizes = [8, 32], strides = [1, 1]} : vector<16x32xf32> to vector<8x32xf32>
    %25 = vector.shape_cast %22 : vector<16x32xf32> to vector<1x16x32xf32>
    %26 = vector.broadcast %25 : vector<1x16x32xf32> to vector<8x16x32xf32>
    %27 = vector.broadcast %21 : vector<8x1x32xf32> to vector<8x16x32xf32>
    %28 = arith.mulf %26, %27 : vector<8x16x32xf32>
    %29 = vector.shape_cast %28 : vector<8x16x32xf32> to vector<128x32xf32>
    "tpu.trace_start"() <{level = 10 : i32, message = "nd,sd->ns"}> : () -> ()
    %cst_25 = arith.constant dense<0.000000e+00> : vector<128x8xf32>
    %30 = tpu.matmul %29, %23, %cst_25 {dimension_numbers = #tpu.dot_dimension_numbers<[1], [1], [0], [0], [0, 0, 1, 0], [], []>} : vector<128x32xf32>, vector<8x32xf32>, vector<128x8xf32> -> vector<128x8xf32>
    "tpu.trace_stop"() : () -> ()
    %cst_26 = arith.constant dense<0xFF800000> : vector<128xf32>
    %31 = vector.multi_reduction <maximumf>, %30, %cst_26 [1] : vector<128x8xf32> to vector<128xf32>
    %32 = vector.shape_cast %31 : vector<128xf32> to vector<128x1xf32>
    %33 = vector.broadcast %32 : vector<128x1xf32> to vector<128x8xf32>
    %34 = arith.subf %30, %33 : vector<128x8xf32>
    %35 = math.exp %34 : vector<128x8xf32>
    %cst_27 = arith.constant dense<0.000000e+00> : vector<128xf32>
    %36 = vector.multi_reduction <add>, %35, %cst_27 [1] : vector<128x8xf32> to vector<128xf32>
    %37 = vector.shape_cast %36 : vector<128xf32> to vector<128x1xf32>
    %38 = vector.broadcast %37 : vector<128x1xf32> to vector<128x8xf32>
    %39 = arith.divf %35, %38 : vector<128x8xf32>
    %40 = tpu.transpose %39, [1, 0] : vector<128x8xf32> -> vector<8x128xf32>
    %c0_28 = arith.constant 0 : index
    %c0_29 = arith.constant 0 : index
    %c0_30 = arith.constant 0 : index
    %41 = vector.load %arg14[%c0_28, %c0_29, %c0_30] : memref<2x8x128xf32, #tpu.memory_space<vmem>>, vector<1x8x128xf32>
    %42 = vector.shape_cast %41 : vector<1x8x128xf32> to vector<8x128xf32>
    %43 = vector.shape_cast %40 : vector<8x128xf32> to vector<1x8x128xf32>
    tpu.vector_store %arg14[%c0_28, %c0_29, %c0_30], %43 {strides = array<i32>} : memref<2x8x128xf32, #tpu.memory_space<vmem>>, vector<1x8x128xf32>,
    %cst_31 = arith.constant dense<0.000000e+00> : vector<128x32xf32>
    %44 = tpu.matmul %39, %24, %cst_31 {dimension_numbers = #tpu.dot_dimension_numbers<[1], [0], [0], [1], [0, 0, 1, 1], [], []>} : vector<128x8xf32>, vector<8x32xf32>, vector<128x32xf32> -> vector<128x32xf32>
    %45 = vector.shape_cast %44 : vector<128x32xf32> to vector<8x16x32xf32>
    %46 = vector.broadcast %21 : vector<8x1x32xf32> to vector<8x16x32xf32>
    %47 = arith.mulf %45, %46 : vector<8x16x32xf32>
    %cst_32 = arith.constant dense<0.000000e+00> : vector<16x32xf32>
    %48 = vector.multi_reduction <add>, %47, %cst_32 [0] : vector<8x16x32xf32> to vector<16x32xf32>
    %49 = vector.extract_strided_slice %10 {offsets = [16, 0], sizes = [16, 32], strides = [1, 1]} : vector<32x32xf32> to vector<16x32xf32>
    %50 = vector.extract_strided_slice %15 {offsets = [8, 0], sizes = [8, 32], strides = [1, 1]} : vector<16x32xf32> to vector<8x32xf32>
    %51 = vector.extract_strided_slice %20 {offsets = [8, 0], sizes = [8, 32], strides = [1, 1]} : vector<16x32xf32> to vector<8x32xf32>
    %52 = vector.shape_cast %49 : vector<16x32xf32> to vector<1x16x32xf32>
    %53 = vector.broadcast %52 : vector<1x16x32xf32> to vector<8x16x32xf32>
    %54 = vector.broadcast %21 : vector<8x1x32xf32> to vector<8x16x32xf32>
    %55 = arith.mulf %53, %54 : vector<8x16x32xf32>
    %56 = vector.shape_cast %55 : vector<8x16x32xf32> to vector<128x32xf32>
    "tpu.trace_start"() <{level = 10 : i32, message = "nd,sd->ns"}> : () -> ()
    %cst_33 = arith.constant dense<0.000000e+00> : vector<128x8xf32>
    %57 = tpu.matmul %56, %50, %cst_33 {dimension_numbers = #tpu.dot_dimension_numbers<[1], [1], [0], [0], [0, 0, 1, 0], [], []>} : vector<128x32xf32>, vector<8x32xf32>, vector<128x8xf32> -> vector<128x8xf32>
    "tpu.trace_stop"() : () -> ()
    %cst_34 = arith.constant dense<0xFF800000> : vector<128xf32>
    %58 = vector.multi_reduction <maximumf>, %57, %cst_34 [1] : vector<128x8xf32> to vector<128xf32>
    %59 = vector.shape_cast %58 : vector<128xf32> to vector<128x1xf32>
    %60 = vector.broadcast %59 : vector<128x1xf32> to vector<128x8xf32>
    %61 = arith.subf %57, %60 : vector<128x8xf32>
    %62 = math.exp %61 : vector<128x8xf32>
    %cst_35 = arith.constant dense<0.000000e+00> : vector<128xf32>
    %63 = vector.multi_reduction <add>, %62, %cst_35 [1] : vector<128x8xf32> to vector<128xf32>
    %64 = vector.shape_cast %63 : vector<128xf32> to vector<128x1xf32>
    %65 = vector.broadcast %64 : vector<128x1xf32> to vector<128x8xf32>
    %66 = arith.divf %62, %65 : vector<128x8xf32>
    %67 = tpu.transpose %66, [1, 0] : vector<128x8xf32> -> vector<8x128xf32>
    %c1 = arith.constant 1 : index
    %c0_36 = arith.constant 0 : index
    %c0_37 = arith.constant 0 : index
    %68 = vector.load %arg14[%c1, %c0_36, %c0_37] : memref<2x8x128xf32, #tpu.memory_space<vmem>>, vector<1x8x128xf32>
    %69 = vector.shape_cast %68 : vector<1x8x128xf32> to vector<8x128xf32>
    %70 = vector.shape_cast %67 : vector<8x128xf32> to vector<1x8x128xf32>
    tpu.vector_store %arg14[%c1, %c0_36, %c0_37], %70 {strides = array<i32>} : memref<2x8x128xf32, #tpu.memory_space<vmem>>, vector<1x8x128xf32>,
    %cst_38 = arith.constant dense<0.000000e+00> : vector<128x32xf32>
    %71 = tpu.matmul %66, %51, %cst_38 {dimension_numbers = #tpu.dot_dimension_numbers<[1], [0], [0], [1], [0, 0, 1, 1], [], []>} : vector<128x8xf32>, vector<8x32xf32>, vector<128x32xf32> -> vector<128x32xf32>
    %72 = vector.shape_cast %71 : vector<128x32xf32> to vector<8x16x32xf32>
    %73 = vector.broadcast %21 : vector<8x1x32xf32> to vector<8x16x32xf32>
    %74 = arith.mulf %72, %73 : vector<8x16x32xf32>
    %cst_39 = arith.constant dense<0.000000e+00> : vector<16x32xf32>
    %75 = vector.multi_reduction <add>, %74, %cst_39 [0] : vector<8x16x32xf32> to vector<16x32xf32>
    %76 = tpu.concatenate %48, %75 in 0 : vector<16x32xf32>, vector<16x32xf32> -> vector<32x32xf32>
    %c0_40 = arith.constant 0 : index
    %c0_41 = arith.constant 0 : index
    %77 = vector.load %arg11[%c0_40, %c0_41] : memref<32x32xf32, #tpu.memory_space<vmem>>, vector<32x32xf32>
    %cst_42 = arith.constant dense<0.000000e+00> : vector<32x32xf32>
    %78 = tpu.matmul %76, %77, %cst_42 {dimension_numbers = #tpu.dot_dimension_numbers<[1], [0], [0], [1], [0, 0, 1, 1], [], []>} : vector<32x32xf32>, vector<32x32xf32>, vector<32x32xf32> -> vector<32x32xf32>
    %c0_43 = arith.constant 0 : index
    %c0_44 = arith.constant 0 : index
    %79 = vector.load %arg12[%c0_43, %c0_44] : memref<1x32xf32, #tpu.memory_space<vmem>>, vector<1x32xf32>
    %80 = vector.broadcast %79 : vector<1x32xf32> to vector<32x32xf32>
    %81 = arith.addf %78, %80 : vector<32x32xf32>
    %82 = vector.shape_cast %81 : vector<32x32xf32> to vector<2x16x32xf32>
    %c0_45 = arith.constant 0 : index
    %c0_46 = arith.constant 0 : index
    %c0_47 = arith.constant 0 : index
    %83 = vector.load %arg13[%c0_45, %c0_46, %c0_47] : memref<2x16x32xf32, #tpu.memory_space<vmem>>, vector<2x16x32xf32>
    tpu.vector_store %arg13[%c0_45, %c0_46, %c0_47], %82 {strides = array<i32>} : memref<2x16x32xf32, #tpu.memory_space<vmem>>, vector<2x16x32xf32>,
    return
  }
  func.func @transform_0(%arg0: i32) -> (i32, i32, i32) {
    %c0_i32 = arith.constant 0 : i32
    %c0_i32_0 = arith.constant 0 : i32
    %c0_i32_1 = arith.constant 0 : i32
    return %arg0, %c0_i32, %c0_i32_0 : i32, i32, i32
  }
  func.func @transform_1(%arg0: i32) -> (i32, i32, i32) {
    %c0_i32 = arith.constant 0 : i32
    %c0_i32_0 = arith.constant 0 : i32
    %c0_i32_1 = arith.constant 0 : i32
    return %arg0, %c0_i32, %c0_i32_0 : i32, i32, i32
  }
  func.func @transform_2(%arg0: i32) -> (i32, i32, i32) {
    %c0_i32 = arith.constant 0 : i32
    %c0_i32_0 = arith.constant 0 : i32
    %c0_i32_1 = arith.constant 0 : i32
    return %arg0, %c0_i32, %c0_i32_0 : i32, i32, i32
  }
  func.func @transform_3(%arg0: i32) -> (i32, i32, i32) {
    %c0_i32 = arith.constant 0 : i32
    %c0_i32_0 = arith.constant 0 : i32
    %c0_i32_1 = arith.constant 0 : i32
    %c0_i32_2 = arith.constant 0 : i32
    return %c0_i32, %c0_i32_0, %c0_i32_1 : i32, i32, i32
  }
  func.func @transform_4(%arg0: i32) -> (i32, i32) {
    %c0_i32 = arith.constant 0 : i32
    %c0_i32_0 = arith.constant 0 : i32
    %c0_i32_1 = arith.constant 0 : i32
    return %c0_i32, %c0_i32_0 : i32, i32
  }
  func.func @transform_5(%arg0: i32) -> (i32, i32) {
    %c0_i32 = arith.constant 0 : i32
    %c0_i32_0 = arith.constant 0 : i32
    %c0_i32_1 = arith.constant 0 : i32
    return %c0_i32, %c0_i32_0 : i32, i32
  }
  func.func @transform_6(%arg0: i32) -> (i32, i32) {
    %c0_i32 = arith.constant 0 : i32
    %c0_i32_0 = arith.constant 0 : i32
    %c0_i32_1 = arith.constant 0 : i32
    return %c0_i32, %c0_i32_0 : i32, i32
  }
  func.func @transform_7(%arg0: i32) -> (i32, i32) {
    %c0_i32 = arith.constant 0 : i32
    %c0_i32_0 = arith.constant 0 : i32
    %c0_i32_1 = arith.constant 0 : i32
    return %c0_i32, %c0_i32_0 : i32, i32
  }
  func.func @transform_8(%arg0: i32) -> (i32, i32) {
    %c0_i32 = arith.constant 0 : i32
    %c0_i32_0 = arith.constant 0 : i32
    %c0_i32_1 = arith.constant 0 : i32
    return %c0_i32, %c0_i32_0 : i32, i32
  }
  func.func @transform_9(%arg0: i32) -> (i32, i32) {
    %c0_i32 = arith.constant 0 : i32
    %c0_i32_0 = arith.constant 0 : i32
    %c0_i32_1 = arith.constant 0 : i32
    return %c0_i32, %c0_i32_0 : i32, i32
  }
  func.func @transform_10(%arg0: i32) -> (i32, i32) {
    %c0_i32 = arith.constant 0 : i32
    %c0_i32_0 = arith.constant 0 : i32
    %c0_i32_1 = arith.constant 0 : i32
    return %c0_i32, %c0_i32_0 : i32, i32
  }
  func.func @transform_11(%arg0: i32) -> (i32, i32) {
    %c0_i32 = arith.constant 0 : i32
    %c0_i32_0 = arith.constant 0 : i32
    %c0_i32_1 = arith.constant 0 : i32
    return %c0_i32, %c0_i32_0 : i32, i32
  }
  func.func @transform_12(%arg0: i32) -> (i32, i32, i32) {
    %c0_i32 = arith.constant 0 : i32
    %c0_i32_0 = arith.constant 0 : i32
    %c0_i32_1 = arith.constant 0 : i32
    return %arg0, %c0_i32, %c0_i32_0 : i32, i32, i32
  }
  func.func @transform_13(%arg0: i32) -> (i32, i32, i32) {
    %c0_i32 = arith.constant 0 : i32
    %c0_i32_0 = arith.constant 0 : i32
    %c0_i32_1 = arith.constant 0 : i32
    return %arg0, %c0_i32, %c0_i32_0 : i32, i32, i32
  }
}

</mosaic_0001>

<llo_original>
// kernel: tpu_custom_call.1
$region0: #{tpu_custom_call.1}
  #allocation0 [shape = 'u32[]', space=smem, size = 0x4, offset = 0x4, fixed_abs, tag = 'smem constant byte address 0x4 - core index']
  #allocation1 [shape = 'u32[144,128]{1,0:T(1,128)}', space=vmem, size = 0x12000, scoped, tag = 'internal scratch']
  %s0 = inlined_call_operand.hbm [shape: f32[4,16,32], index: 0, kind: input, shape index: {}]
  %s1 = inlined_call_operand.hbm [shape: f32[4,8,32], index: 1, kind: input, shape index: {}]
  %s2 = inlined_call_operand.hbm [shape: f32[4,8,32], index: 2, kind: input, shape index: {}]
  %s3 = inlined_call_operand.hbm [shape: f32[8,1,32], index: 3, kind: input, shape index: {}]
  %s4 = inlined_call_operand.hbm [shape: f32[32,32], index: 4, kind: input, shape index: {}]
  %s5 = inlined_call_operand.vmem [shape: f32[1,32], index: 5, kind: input, shape index: {}]
  %s6 = inlined_call_operand.hbm [shape: f32[32,32], index: 6, kind: input, shape index: {}]
  %s7 = inlined_call_operand.vmem [shape: f32[1,32], index: 7, kind: input, shape index: {}]
  %s8 = inlined_call_operand.hbm [shape: f32[32,32], index: 8, kind: input, shape index: {}]
  %s9 = inlined_call_operand.vmem [shape: f32[1,32], index: 9, kind: input, shape index: {}]
  %s10 = inlined_call_operand.hbm [shape: f32[32,32], index: 10, kind: input, shape index: {}]
  %s11 = inlined_call_operand.vmem [shape: f32[1,32], index: 11, kind: input, shape index: {}]
  %s12 = inlined_call_operand.hbm [shape: f32[4,16,32], index: 12, kind: output, shape index: {0}]
  %s13 = inlined_call_operand.hbm [shape: f32[4,8,128], index: 13, kind: output, shape index: {1}]
  %14 = xla_tuple %s12, %s13
  %s15 = sld [smem:[#allocation0]]
  $region121: #{tpu_custom_call.1} parent=0
    _
  %s17 = ssub.s32 1, %s15
  %s18 = scalar_select 0, %s17, %s15
  $region1: #{tpu_custom_call.1} parent=0
    #allocation2 [shape = 'u8[32768]{0}', space=vmem, size = 0x8000, scoped, tag = 'input window, operand 0']
    #allocation3 [shape = 's32[2]{0}', space=sflag, size = 0x8, scoped, tag = 'scoped memory for tpu_custom_call.1']
    #allocation4 [shape = 's32[2]{0}', space=sflag, size = 0x8, scoped, tag = 'scoped memory for tpu_custom_call.1']
    #allocation5 [shape = 'u8[16384]{0}', space=vmem, size = 0x4000, scoped, tag = 'input window, operand 1']
    #allocation6 [shape = 's32[2]{0}', space=sflag, size = 0x8, scoped, tag = 'scoped memory for tpu_custom_call.1']
    #allocation7 [shape = 'u8[16384]{0}', space=vmem, size = 0x4000, scoped, tag = 'input window, operand 2']
    #allocation8 [shape = 'u8[4096]{0}', space=vmem, size = 0x1000, scoped, tag = 'input window, operand 3, single buffered']
    #allocation9 [shape = 's32[1]{0}', space=sflag, size = 0x4, scoped, tag = 'scoped memory for tpu_custom_call.1']
    #allocation10 [shape = 'u8[16384]{0}', space=vmem, size = 0x4000, scoped, tag = 'input window, operand 4, single buffered']
    #allocation11 [shape = 'u8[16384]{0}', space=vmem, size = 0x4000, scoped, tag = 'input window, operand 6, single buffered']
    #allocation12 [shape = 's32[1]{0}', space=sflag, size = 0x4, scoped, tag = 'scoped memory for tpu_custom_call.1']
    #allocation13 [shape = 'u8[16384]{0}', space=vmem, size = 0x4000, scoped, tag = 'input window, operand 8, single buffered']
    #allocation14 [shape = 'u8[16384]{0}', space=vmem, size = 0x4000, scoped, tag = 'input window, operand 10, single buffered']
    #allocation15 [shape = 's32[1]{0}', space=sflag, size = 0x4, scoped, tag = 'scoped memory for tpu_custom_call.1']
    #allocation16 [shape = 'u8[32768]{0}', space=vmem, size = 0x8000, scoped, tag = 'output window, operand 0']
    #allocation17 [shape = 'u8[16384]{0}', space=vmem, size = 0x4000, scoped, tag = 'output window, operand 1']
    #allocation18 [shape = 's32[2]{0}', space=sflag, size = 0x8, scoped, tag = 'scoped memory for tpu_custom_call.1']
    %19 = vsyncpa [#allocation3], 0
    %s20 = scalar_lea.sflag [#allocation3], 1
    %21 = vsyncpa %s20, 0
    %22 = vsyncpa [#allocation6], 0
    %s23 = scalar_lea.sflag [#allocation6], 1
    %24 = vsyncpa %s23, 0
    %25 = vsyncpa [#allocation9], 0
    %26 = vsyncpa [#allocation12], 0
    %27 = vsyncpa [#allocation15], 0
    %28 = vsyncpa [#allocation4], 0
    %s29 = scalar_lea.sflag [#allocation4], 1
    %30 = vsyncpa %s29, 0
    %31 = vsyncpa [#allocation18], 0
    %s32 = scalar_lea.sflag [#allocation18], 1
    %33 = vsyncpa %s32, 0
    loop: start=0, step=1, limit=4
    $region2: #{tpu_custom_call.1} parent=1 // loop_pre_header
      _
    $region3: #{tpu_custom_call.1} parent=1 // loop_header
      %s35 = sphi 0, %s39
      %p36 = scmp.ge.s32.totalorder %s35, 4
      %s45 = sphi 0, %s47
      %s48 = sphi 0, %s45
      %s49 = sphi 0, %s48
      %s65 = sphi 0, %s49
      %s71 = sphi 0, %s73
      %s74 = sphi 0, %s71
      %s75 = sphi 0, %s74
      %s91 = sphi 0, %s75
      %s97 = sphi 0, %s99
      %s100 = sphi 0, %s97
      %s101 = sphi 0, %s100
      %s117 = sphi 0, %s101
      %s121 = sphi 0, %s121
      %s123 = sphi 0, %s121
      %s124 = sphi 0, %s123
      %s138 = sphi 0, %s124
      %s142 = sphi 0, %s142
      %s144 = sphi 0, %s142
      %s145 = sphi 0, %s144
      %s159 = sphi 0, %s145
      %s163 = sphi 0, %s163
      %s165 = sphi 0, %s163
      %s166 = sphi 0, %s165
      %s180 = sphi 0, %s166
      %s184 = sphi 0, %s184
      %s186 = sphi 0, %s184
      %s187 = sphi 0, %s186
      %s201 = sphi 0, %s187
      %s205 = sphi 0, %s205
      %s207 = sphi 0, %s205
      %s208 = sphi 0, %s207
      %s222 = sphi 0, %s208
      %s226 = sphi 0, %s226
      %s228 = sphi 0, %s226
      %s229 = sphi 0, %s228
      %s243 = sphi 0, %s229
      %s247 = sphi 0, %s247
      %s249 = sphi 0, %s247
      %s250 = sphi 0, %s249
      %s264 = sphi 0, %s250
      %s268 = sphi 0, %s268
      %s270 = sphi 0, %s268
      %s271 = sphi 0, %s270
      %s285 = sphi 0, %s271
      %s289 = sphi 0, %s289
      %s291 = sphi 0, %s289
      %s292 = sphi 0, %s291
      %s306 = sphi 0, %s292
      %s312 = sphi 0, %s314
      %s315 = sphi 0, %s312
      %s316 = sphi 0, %s315
      %s332 = sphi 0, %s316
      %s338 = sphi 0, %s340
      %s341 = sphi 0, %s338
      %s342 = sphi 0, %s341
      %s358 = sphi 0, %s342
    $region4: #{tpu_custom_call.1} parent=1 // loop_header_branch
      %38 = sbr.rel (%p36) target = $region8
    $region5: #{tpu_custom_call.1} parent=1 // loop_body
      %s40 = ssub.s32 %s35, 1
      %s41 = ssub.s32 %s35, 2
      %s42 = sadd.s32 %s35, 1
      %s43 = ssub.s32 %s35, %s42
      %p44 = scmp.eq.s32.totalorder %s43, 0
      %s46 = sadd.s32 %s45, 1
      %s47 = scalar_select %p44, %s45, %s46
      %p50 = pneg %p44
      %p51 = scmp.eq.s32.totalorder %s35, 1
      %p52 = por %p50, %p51
      %p53 = scmp.ne.s32.totalorder %s45, %s48
      %p54 = scmp.eq.s32.totalorder %s35, 0
      %p55 = por %p53, %p54
      %p56 = scmp.ne.s32.totalorder %s45, %s48
      %p57 = scmp.eq.s32.totalorder %s40, 1
      %p58 = por %p56, %p57
      %p59 = scmp.ne.s32.totalorder %s48, %s49
      %p60 = scmp.eq.s32.totalorder %s40, 0
      %p61 = por %p59, %p60
      %p62 = scmp.ne.s32.totalorder %s48, %s49
      %p63 = scmp.eq.s32.totalorder %s41, 1
      %p64 = por %p62, %p63
      %p66 = scmp.ne.s32.totalorder %s49, %s65
      %p67 = scmp.eq.s32.totalorder %s41, 0
      %p68 = por %p66, %p67
      %s69 = ssub.s32 %s35, %s42
      %p70 = scmp.eq.s32.totalorder %s69, 0
      %s72 = sadd.s32 %s71, 1
      %s73 = scalar_select %p70, %s71, %s72
      %p76 = pneg %p70
      %p77 = scmp.eq.s32.totalorder %s35, 1
      %p78 = por %p76, %p77
      %p79 = scmp.ne.s32.totalorder %s71, %s74
      %p80 = scmp.eq.s32.totalorder %s35, 0
      %p81 = por %p79, %p80
      %p82 = scmp.ne.s32.totalorder %s71, %s74
      %p83 = scmp.eq.s32.totalorder %s40, 1
      %p84 = por %p82, %p83
      %p85 = scmp.ne.s32.totalorder %s74, %s75
      %p86 = scmp.eq.s32.totalorder %s40, 0
      %p87 = por %p85, %p86
      %p88 = scmp.ne.s32.totalorder %s74, %s75
      %p89 = scmp.eq.s32.totalorder %s41, 1
      %p90 = por %p88, %p89
      %p92 = scmp.ne.s32.totalorder %s75, %s91
      %p93 = scmp.eq.s32.totalorder %s41, 0
      %p94 = por %p92, %p93
      %s95 = ssub.s32 %s35, %s42
      %p96 = scmp.eq.s32.totalorder %s95, 0
      %s98 = sadd.s32 %s97, 1
      %s99 = scalar_select %p96, %s97, %s98
      %p102 = pneg %p96
      %p103 = scmp.eq.s32.totalorder %s35, 1
      %p104 = por %p102, %p103
      %p105 = scmp.ne.s32.totalorder %s97, %s100
      %p106 = scmp.eq.s32.totalorder %s35, 0
      %p107 = por %p105, %p106
      %p108 = scmp.ne.s32.totalorder %s97, %s100
      %p109 = scmp.eq.s32.totalorder %s40, 1
      %p110 = por %p108, %p109
      %p111 = scmp.ne.s32.totalorder %s100, %s101
      %p112 = scmp.eq.s32.totalorder %s40, 0
      %p113 = por %p111, %p112
      %p114 = scmp.ne.s32.totalorder %s100, %s101
      %p115 = scmp.eq.s32.totalorder %s41, 1
      %p116 = por %p114, %p115
      %p118 = scmp.ne.s32.totalorder %s101, %s117
      %p119 = scmp.eq.s32.totalorder %s41, 0
      %p120 = por %p118, %p119
      %s122 = sadd.s32 %s121, 1
      %p125 = scmp.eq.s32.totalorder %s35, 1
      %p126 = scmp.ne.s32.totalorder %s121, %s123
      %p127 = scmp.eq.s32.totalorder %s35, 0
      %p128 = por %p126, %p127
      %p129 = scmp.ne.s32.totalorder %s121, %s123
      %p130 = scmp.eq.s32.totalorder %s40, 1
      %p131 = por %p129, %p130
      %p132 = scmp.ne.s32.totalorder %s123, %s124
      %p133 = scmp.eq.s32.totalorder %s40, 0
      %p134 = por %p132, %p133
      %p135 = scmp.ne.s32.totalorder %s123, %s124
      %p136 = scmp.eq.s32.totalorder %s41, 1
      %p137 = por %p135, %p136
      %p139 = scmp.ne.s32.totalorder %s124, %s138
      %p140 = scmp.eq.s32.totalorder %s41, 0
      %p141 = por %p139, %p140
      %s143 = sadd.s32 %s142, 1
      %p146 = scmp.eq.s32.totalorder %s35, 1
      %p147 = scmp.ne.s32.totalorder %s142, %s144
      %p148 = scmp.eq.s32.totalorder %s35, 0
      %p149 = por %p147, %p148
      %p150 = scmp.ne.s32.totalorder %s142, %s144
      %p151 = scmp.eq.s32.totalorder %s40, 1
      %p152 = por %p150, %p151
      %p153 = scmp.ne.s32.totalorder %s144, %s145
      %p154 = scmp.eq.s32.totalorder %s40, 0
      %p155 = por %p153, %p154
      %p156 = scmp.ne.s32.totalorder %s144, %s145
      %p157 = scmp.eq.s32.totalorder %s41, 1
      %p158 = por %p156, %p157
      %p160 = scmp.ne.s32.totalorder %s145, %s159
      %p161 = scmp.eq.s32.totalorder %s41, 0
      %p162 = por %p160, %p161
      %s164 = sadd.s32 %s163, 1
      %p167 = scmp.eq.s32.totalorder %s35, 1
      %p168 = scmp.ne.s32.totalorder %s163, %s165
      %p169 = scmp.eq.s32.totalorder %s35, 0
      %p170 = por %p168, %p169
      %p171 = scmp.ne.s32.totalorder %s163, %s165
      %p172 = scmp.eq.s32.totalorder %s40, 1
      %p173 = por %p171, %p172
      %p174 = scmp.ne.s32.totalorder %s165, %s166
      %p175 = scmp.eq.s32.totalorder %s40, 0
      %p176 = por %p174, %p175
      %p177 = scmp.ne.s32.totalorder %s165, %s166
      %p178 = scmp.eq.s32.totalorder %s41, 1
      %p179 = por %p177, %p178
      %p181 = scmp.ne.s32.totalorder %s166, %s180
      %p182 = scmp.eq.s32.totalorder %s41, 0
      %p183 = por %p181, %p182
      %s185 = sadd.s32 %s184, 1
      %p188 = scmp.eq.s32.totalorder %s35, 1
      %p189 = scmp.ne.s32.totalorder %s184, %s186
      %p190 = scmp.eq.s32.totalorder %s35, 0
      %p191 = por %p189, %p190
      %p192 = scmp.ne.s32.totalorder %s184, %s186
      %p193 = scmp.eq.s32.totalorder %s40, 1
      %p194 = por %p192, %p193
      %p195 = scmp.ne.s32.totalorder %s186, %s187
      %p196 = scmp.eq.s32.totalorder %s40, 0
      %p197 = por %p195, %p196
      %p198 = scmp.ne.s32.totalorder %s186, %s187
      %p199 = scmp.eq.s32.totalorder %s41, 1
      %p200 = por %p198, %p199
      %p202 = scmp.ne.s32.totalorder %s187, %s201
      %p203 = scmp.eq.s32.totalorder %s41, 0
      %p204 = por %p202, %p203
      %s206 = sadd.s32 %s205, 1
      %p209 = scmp.eq.s32.totalorder %s35, 1
      %p210 = scmp.ne.s32.totalorder %s205, %s207
      %p211 = scmp.eq.s32.totalorder %s35, 0
      %p212 = por %p210, %p211
      %p213 = scmp.ne.s32.totalorder %s205, %s207
      %p214 = scmp.eq.s32.totalorder %s40, 1
      %p215 = por %p213, %p214
      %p216 = scmp.ne.s32.totalorder %s207, %s208
      %p217 = scmp.eq.s32.totalorder %s40, 0
      %p218 = por %p216, %p217
      %p219 = scmp.ne.s32.totalorder %s207, %s208
      %p220 = scmp.eq.s32.totalorder %s41, 1
      %p221 = por %p219, %p220
      %p223 = scmp.ne.s32.totalorder %s208, %s222
      %p224 = scmp.eq.s32.totalorder %s41, 0
      %p225 = por %p223, %p224
      %s227 = sadd.s32 %s226, 1
      %p230 = scmp.eq.s32.totalorder %s35, 1
      %p231 = scmp.ne.s32.totalorder %s226, %s228
      %p232 = scmp.eq.s32.totalorder %s35, 0
      %p233 = por %p231, %p232
      %p234 = scmp.ne.s32.totalorder %s226, %s228
      %p235 = scmp.eq.s32.totalorder %s40, 1
      %p236 = por %p234, %p235
      %p237 = scmp.ne.s32.totalorder %s228, %s229
      %p238 = scmp.eq.s32.totalorder %s40, 0
      %p239 = por %p237, %p238
      %p240 = scmp.ne.s32.totalorder %s228, %s229
      %p241 = scmp.eq.s32.totalorder %s41, 1
      %p242 = por %p240, %p241
      %p244 = scmp.ne.s32.totalorder %s229, %s243
      %p245 = scmp.eq.s32.totalorder %s41, 0
      %p246 = por %p244, %p245
      %s248 = sadd.s32 %s247, 1
      %p251 = scmp.eq.s32.totalorder %s35, 1
      %p252 = scmp.ne.s32.totalorder %s247, %s249
      %p253 = scmp.eq.s32.totalorder %s35, 0
      %p254 = por %p252, %p253
      %p255 = scmp.ne.s32.totalorder %s247, %s249
      %p256 = scmp.eq.s32.totalorder %s40, 1
      %p257 = por %p255, %p256
      %p258 = scmp.ne.s32.totalorder %s249, %s250
      %p259 = scmp.eq.s32.totalorder %s40, 0
      %p260 = por %p258, %p259
      %p261 = scmp.ne.s32.totalorder %s249, %s250
      %p262 = scmp.eq.s32.totalorder %s41, 1
      %p263 = por %p261, %p262
      %p265 = scmp.ne.s32.totalorder %s250, %s264
      %p266 = scmp.eq.s32.totalorder %s41, 0
      %p267 = por %p265, %p266
      %s269 = sadd.s32 %s268, 1
      %p272 = scmp.eq.s32.totalorder %s35, 1
      %p273 = scmp.ne.s32.totalorder %s268, %s270
      %p274 = scmp.eq.s32.totalorder %s35, 0
      %p275 = por %p273, %p274
      %p276 = scmp.ne.s32.totalorder %s268, %s270
      %p277 = scmp.eq.s32.totalorder %s40, 1
      %p278 = por %p276, %p277
      %p279 = scmp.ne.s32.totalorder %s270, %s271
      %p280 = scmp.eq.s32.totalorder %s40, 0
      %p281 = por %p279, %p280
      %p282 = scmp.ne.s32.totalorder %s270, %s271
      %p283 = scmp.eq.s32.totalorder %s41, 1
      %p284 = por %p282, %p283
      %p286 = scmp.ne.s32.totalorder %s271, %s285
      %p287 = scmp.eq.s32.totalorder %s41, 0
      %p288 = por %p286, %p287
      %s290 = sadd.s32 %s289, 1
      %p293 = scmp.eq.s32.totalorder %s35, 1
      %p294 = scmp.ne.s32.totalorder %s289, %s291
      %p295 = scmp.eq.s32.totalorder %s35, 0
      %p296 = por %p294, %p295
      %p297 = scmp.ne.s32.totalorder %s289, %s291
      %p298 = scmp.eq.s32.totalorder %s40, 1
      %p299 = por %p297, %p298
      %p300 = scmp.ne.s32.totalorder %s291, %s292
      %p301 = scmp.eq.s32.totalorder %s40, 0
      %p302 = por %p300, %p301
      %p303 = scmp.ne.s32.totalorder %s291, %s292
      %p304 = scmp.eq.s32.totalorder %s41, 1
      %p305 = por %p303, %p304
      %p307 = scmp.ne.s32.totalorder %s292, %s306
      %p308 = scmp.eq.s32.totalorder %s41, 0
      %p309 = por %p307, %p308
      %s310 = ssub.s32 %s35, %s42
      %p311 = scmp.eq.s32.totalorder %s310, 0
      %s313 = sadd.s32 %s312, 1
      %s314 = scalar_select %p311, %s312, %s313
      %p317 = pneg %p311
      %p318 = scmp.eq.s32.totalorder %s35, 1
      %p319 = por %p317, %p318
      %p320 = scmp.ne.s32.totalorder %s312, %s315
      %p321 = scmp.eq.s32.totalorder %s35, 0
      %p322 = por %p320, %p321
      %p323 = scmp.ne.s32.totalorder %s312, %s315
      %p324 = scmp.eq.s32.totalorder %s40, 1
      %p325 = por %p323, %p324
      %p326 = scmp.ne.s32.totalorder %s315, %s316
      %p327 = scmp.eq.s32.totalorder %s40, 0
      %p328 = por %p326, %p327
      %p329 = scmp.ne.s32.totalorder %s315, %s316
      %p330 = scmp.eq.s32.totalorder %s41, 1
      %p331 = por %p329, %p330
      %p333 = scmp.ne.s32.totalorder %s316, %s332
      %p334 = scmp.eq.s32.totalorder %s41, 0
      %p335 = por %p333, %p334
      %s336 = ssub.s32 %s35, %s42
      %p337 = scmp.eq.s32.totalorder %s336, 0
      %s339 = sadd.s32 %s338, 1
      %s340 = scalar_select %p337, %s338, %s339
      %p343 = pneg %p337
      %p344 = scmp.eq.s32.totalorder %s35, 1
      %p345 = por %p343, %p344
      %p346 = scmp.ne.s32.totalorder %s338, %s341
      %p347 = scmp.eq.s32.totalorder %s35, 0
      %p348 = por %p346, %p347
      %p349 = scmp.ne.s32.totalorder %s338, %s341
      %p350 = scmp.eq.s32.totalorder %s40, 1
      %p351 = por %p349, %p350
      %p352 = scmp.ne.s32.totalorder %s341, %s342
      %p353 = scmp.eq.s32.totalorder %s40, 0
      %p354 = por %p352, %p353
      %p355 = scmp.ne.s32.totalorder %s341, %s342
      %p356 = scmp.eq.s32.totalorder %s41, 1
      %p357 = por %p355, %p356
      %p359 = scmp.ne.s32.totalorder %s342, %s358
      %p360 = scmp.eq.s32.totalorder %s41, 0
      %p361 = por %p359, %p360
      %p362 = scmp.le.s32.totalorder 1, %s35
      %p363 = scmp.lt.s32.totalorder %s35, 3
      %p364 = pnand %p362, %p363
      %p365 = pneg %p364
      // Predicated region
      $region9: #{tpu_custom_call.1} parent=5 // pred_check
        _
      $region10: #{tpu_custom_call.1} parent=5 // pred_check_branch
        %367 = sbr.rel (%p364) target = $region12
      $region11: #{tpu_custom_call.1} parent=5 // pred_region
        %s368 = ssub.s32 %s35, 1
        // Predicated region
        $region13: #{tpu_custom_call.1} parent=11 // pred_check
          %p369 = pneg %p134
        $region14: #{tpu_custom_call.1} parent=11 // pred_check_branch
          %371 = sbr.rel (%p369) target = $region16
        $region15: #{tpu_custom_call.1} parent=11 // pred_region
          %s373 = ssub.s32 128, 128
          %374 = vsyncadd [#allocation9], %s373
          %s375 = sshll.u32 [#allocation8], 4
          %s376 = int_to_ptr.vmem [resolvable:$true] %s375
          %381 = dma.hbm_to_vmem [thread:$0]  %s3, 128, %s376, [#allocation9], 16, 16, 1
        $region16: #{tpu_custom_call.1} parent=11 // pred_fallthru
          _
        // Predicated region
        $region17: #{tpu_custom_call.1} parent=11 // pred_check
          %p382 = pneg %p155
        $region18: #{tpu_custom_call.1} parent=11 // pred_check_branch
          %384 = sbr.rel (%p382) target = $region20
        $region19: #{tpu_custom_call.1} parent=11 // pred_region
          %s386 = ssub.s32 512, 512
          %387 = vsyncadd [#allocation9], %s386
          %s388 = sshll.u32 [#allocation10], 4
          %s389 = int_to_ptr.vmem [resolvable:$true] %s388
          %394 = dma.hbm_to_vmem [thread:$0]  %s4, 512, %s389, [#allocation9], 128, 128, 8
        $region20: #{tpu_custom_call.1} parent=11 // pred_fallthru
          _
        // Predicated region
        $region21: #{tpu_custom_call.1} parent=11 // pred_check
          %p395 = pneg %p176
        $region22: #{tpu_custom_call.1} parent=11 // pred_check_branch
          %397 = sbr.rel (%p395) target = $region24
        $region23: #{tpu_custom_call.1} parent=11 // pred_region
          _
        $region24: #{tpu_custom_call.1} parent=11 // pred_fallthru
          _
        // Predicated region
        $region25: #{tpu_custom_call.1} parent=11 // pred_check
          %p398 = pneg %p197
        $region26: #{tpu_custom_call.1} parent=11 // pred_check_branch
          %400 = sbr.rel (%p398) target = $region28
        $region27: #{tpu_custom_call.1} parent=11 // pred_region
          %s402 = ssub.s32 512, 512
          %403 = vsyncadd [#allocation12], %s402
          %s404 = sshll.u32 [#allocation11], 4
          %s405 = int_to_ptr.vmem [resolvable:$true] %s404
          %410 = dma.hbm_to_vmem [thread:$0]  %s6, 512, %s405, [#allocation12], 128, 128, 8
        $region28: #{tpu_custom_call.1} parent=11 // pred_fallthru
          _
        // Predicated region
        $region29: #{tpu_custom_call.1} parent=11 // pred_check
          %p411 = pneg %p218
        $region30: #{tpu_custom_call.1} parent=11 // pred_check_branch
          %413 = sbr.rel (%p411) target = $region32
        $region31: #{tpu_custom_call.1} parent=11 // pred_region
          _
        $region32: #{tpu_custom_call.1} parent=11 // pred_fallthru
          _
        // Predicated region
        $region33: #{tpu_custom_call.1} parent=11 // pred_check
          %p414 = pneg %p239
        $region34: #{tpu_custom_call.1} parent=11 // pred_check_branch
          %416 = sbr.rel (%p414) target = $region36
        $region35: #{tpu_custom_call.1} parent=11 // pred_region
          %s418 = ssub.s32 512, 512
          %419 = vsyncadd [#allocation12], %s418
          %s420 = sshll.u32 [#allocation13], 4
          %s421 = int_to_ptr.vmem [resolvable:$true] %s420
          %426 = dma.hbm_to_vmem [thread:$0]  %s8, 512, %s421, [#allocation12], 128, 128, 8
        $region36: #{tpu_custom_call.1} parent=11 // pred_fallthru
          _
        // Predicated region
        $region37: #{tpu_custom_call.1} parent=11 // pred_check
          %p427 = pneg %p260
        $region38: #{tpu_custom_call.1} parent=11 // pred_check_branch
          %429 = sbr.rel (%p427) target = $region40
        $region39: #{tpu_custom_call.1} parent=11 // pred_region
          _
        $region40: #{tpu_custom_call.1} parent=11 // pred_fallthru
          _
        // Predicated region
        $region41: #{tpu_custom_call.1} parent=11 // pred_check
          %p430 = pneg %p281
        $region42: #{tpu_custom_call.1} parent=11 // pred_check_branch
          %432 = sbr.rel (%p430) target = $region44
        $region43: #{tpu_custom_call.1} parent=11 // pred_region
          %s434 = ssub.s32 512, 512
          %435 = vsyncadd [#allocation15], %s434
          %s436 = sshll.u32 [#allocation14], 4
          %s437 = int_to_ptr.vmem [resolvable:$true] %s436
          %442 = dma.hbm_to_vmem [thread:$0]  %s10, 512, %s437, [#allocation15], 128, 128, 8
        $region44: #{tpu_custom_call.1} parent=11 // pred_fallthru
          _
        // Predicated region
        $region45: #{tpu_custom_call.1} parent=11 // pred_check
          %p443 = pneg %p302
        $region46: #{tpu_custom_call.1} parent=11 // pred_check_branch
          %445 = sbr.rel (%p443) target = $region48
        $region47: #{tpu_custom_call.1} parent=11 // pred_region
          _
        $region48: #{tpu_custom_call.1} parent=11 // pred_fallthru
          _
      $region12: #{tpu_custom_call.1} parent=5 // pred_fallthru
        _
      %p446 = scmp.lt.s32.totalorder %s35, 2
      // Predicated region
      $region49: #{tpu_custom_call.1} parent=5 // pred_check
        %p447 = pneg %p446
      $region50: #{tpu_custom_call.1} parent=5 // pred_check_branch
        %449 = sbr.rel (%p447) target = $region52
      $region51: #{tpu_custom_call.1} parent=5 // pred_region
        // Predicated region
        $region53: #{tpu_custom_call.1} parent=51 // pred_check
          %p450 = pneg %p55
        $region54: #{tpu_custom_call.1} parent=51 // pred_check_branch
          %452 = sbr.rel (%p450) target = $region56
        $region55: #{tpu_custom_call.1} parent=51 // pred_region
          %s453 = sand.u32 %s45, 1
          %s454 = scalar_lea.sflag [#allocation3], %s453
          %s455 = sand.u32 %s45, 1
          %s456 = smul.addr %s455, 32
          %s457 = scalar_lea.vmem [#allocation2], %s456
          %s458 = smul.u32 2, %s35
          %s460 = ssub.s32 512, 512
          %461 = vsyncadd %s454, %s460
          %s462 = smul.addr %s458, 2
          %s463 = smul.addr %s462, 128
          %s464 = scalar_lea.hbm %s0, %s463
          %s465 = sshll.u32 %s457, 4
          %s466 = int_to_ptr.vmem [resolvable:$true] %s465
          %471 = dma.hbm_to_vmem [thread:$0]  %s464, 512, %s466, %s454, 128, 128, 8
        $region56: #{tpu_custom_call.1} parent=51 // pred_fallthru
          _
        // Predicated region
        $region57: #{tpu_custom_call.1} parent=51 // pred_check
          %p472 = pneg %p81
        $region58: #{tpu_custom_call.1} parent=51 // pred_check_branch
          %474 = sbr.rel (%p472) target = $region60
        $region59: #{tpu_custom_call.1} parent=51 // pred_region
          %s475 = sand.u32 %s35, 1
          %s476 = scalar_lea.sflag [#allocation6], %s475
          %s477 = sand.u32 %s71, 1
          %s478 = smul.addr %s477, 16
          %s479 = scalar_lea.vmem [#allocation5], %s478
          %s480 = smul.u32 2, %s35
          %s482 = ssub.s32 256, 256
          %483 = vsyncadd %s476, %s482
          %s484 = smul.addr %s480, 128
          %s485 = scalar_lea.hbm %s1, %s484
          %s486 = sshll.u32 %s479, 4
          %s487 = int_to_ptr.vmem [resolvable:$true] %s486
          %492 = dma.hbm_to_vmem [thread:$0]  %s485, 256, %s487, %s476, 128, 128, 8
        $region60: #{tpu_custom_call.1} parent=51 // pred_fallthru
          _
        // Predicated region
        $region61: #{tpu_custom_call.1} parent=51 // pred_check
          %p493 = pneg %p107
        $region62: #{tpu_custom_call.1} parent=51 // pred_check_branch
          %495 = sbr.rel (%p493) target = $region64
        $region63: #{tpu_custom_call.1} parent=51 // pred_region
          %s496 = sand.u32 %s35, 1
          %s497 = scalar_lea.sflag [#allocation6], %s496
          %s498 = sand.u32 %s97, 1
          %s499 = smul.addr %s498, 16
          %s500 = scalar_lea.vmem [#allocation7], %s499
          %s501 = smul.u32 2, %s35
          %s503 = ssub.s32 256, 256
          %504 = vsyncadd %s497, %s503
          %s505 = smul.addr %s501, 128
          %s506 = scalar_lea.hbm %s2, %s505
          %s507 = sshll.u32 %s500, 4
          %s508 = int_to_ptr.vmem [resolvable:$true] %s507
          %513 = dma.hbm_to_vmem [thread:$0]  %s506, 256, %s508, %s497, 128, 128, 8
        $region64: #{tpu_custom_call.1} parent=51 // pred_fallthru
          _
      $region52: #{tpu_custom_call.1} parent=5 // pred_fallthru
        _
      %p514 = scmp.le.s32.totalorder 1, %s35
      %p515 = scmp.lt.s32.totalorder %s35, 3
      %p516 = pnand %p514, %p515
      %p517 = pneg %p516
      // Predicated region
      $region65: #{tpu_custom_call.1} parent=5 // pred_check
        _
      $region66: #{tpu_custom_call.1} parent=5 // pred_check_branch
        %519 = sbr.rel (%p516) target = $region68
      $region67: #{tpu_custom_call.1} parent=5 // pred_region
        %s520 = ssub.s32 %s35, 1
        %s521 = sand.u32 %s48, 1
        %s522 = scalar_lea.sflag [#allocation3], %s521
        %s523 = sand.u32 %s48, 1
        %s524 = smul.addr %s523, 32
        %s525 = scalar_lea.vmem [#allocation2], %s524
        // Predicated region
        $region69: #{tpu_custom_call.1} parent=67 // pred_check
          %p526 = pneg %p61
        $region70: #{tpu_custom_call.1} parent=67 // pred_check_branch
          %528 = sbr.rel (%p526) target = $region72
        $region71: #{tpu_custom_call.1} parent=67 // pred_region
          %529 = dma.done %s522, 512
        $region72: #{tpu_custom_call.1} parent=67 // pred_fallthru
          _
        %s530 = sand.u32 %s40, 1
        %s531 = scalar_lea.sflag [#allocation6], %s530
        %s532 = sand.u32 %s74, 1
        %s533 = smul.addr %s532, 16
        %s534 = scalar_lea.vmem [#allocation5], %s533
        // Predicated region
        $region73: #{tpu_custom_call.1} parent=67 // pred_check
          %p535 = pneg %p87
        $region74: #{tpu_custom_call.1} parent=67 // pred_check_branch
          %537 = sbr.rel (%p535) target = $region76
        $region75: #{tpu_custom_call.1} parent=67 // pred_region
          %538 = dma.done %s531, 256
        $region76: #{tpu_custom_call.1} parent=67 // pred_fallthru
          _
        %s539 = sand.u32 %s40, 1
        %s540 = scalar_lea.sflag [#allocation6], %s539
        %s541 = sand.u32 %s100, 1
        %s542 = smul.addr %s541, 16
        %s543 = scalar_lea.vmem [#allocation7], %s542
        // Predicated region
        $region77: #{tpu_custom_call.1} parent=67 // pred_check
          %p544 = pneg %p113
        $region78: #{tpu_custom_call.1} parent=67 // pred_check_branch
          %546 = sbr.rel (%p544) target = $region80
        $region79: #{tpu_custom_call.1} parent=67 // pred_region
          %547 = dma.done %s540, 256
        $region80: #{tpu_custom_call.1} parent=67 // pred_fallthru
          _
        // Predicated region
        $region81: #{tpu_custom_call.1} parent=67 // pred_check
          %p548 = pneg %p134
        $region82: #{tpu_custom_call.1} parent=67 // pred_check_branch
          %550 = sbr.rel (%p548) target = $region84
        $region83: #{tpu_custom_call.1} parent=67 // pred_region
          %551 = dma.done [#allocation9], 128
        $region84: #{tpu_custom_call.1} parent=67 // pred_fallthru
          _
        // Predicated region
        $region85: #{tpu_custom_call.1} parent=67 // pred_check
          %p552 = pneg %p155
        $region86: #{tpu_custom_call.1} parent=67 // pred_check_branch
          %554 = sbr.rel (%p552) target = $region88
        $region87: #{tpu_custom_call.1} parent=67 // pred_region
          %555 = dma.done [#allocation9], 512
        $region88: #{tpu_custom_call.1} parent=67 // pred_fallthru
          _
        // Predicated region
        $region89: #{tpu_custom_call.1} parent=67 // pred_check
          %p556 = pneg %p197
        $region90: #{tpu_custom_call.1} parent=67 // pred_check_branch
          %558 = sbr.rel (%p556) target = $region92
        $region91: #{tpu_custom_call.1} parent=67 // pred_region
          %559 = dma.done [#allocation12], 512
        $region92: #{tpu_custom_call.1} parent=67 // pred_fallthru
          _
        // Predicated region
        $region93: #{tpu_custom_call.1} parent=67 // pred_check
          %p560 = pneg %p239
        $region94: #{tpu_custom_call.1} parent=67 // pred_check_branch
          %562 = sbr.rel (%p560) target = $region96
        $region95: #{tpu_custom_call.1} parent=67 // pred_region
          %563 = dma.done [#allocation12], 512
        $region96: #{tpu_custom_call.1} parent=67 // pred_fallthru
          _
        // Predicated region
        $region97: #{tpu_custom_call.1} parent=67 // pred_check
          %p564 = pneg %p281
        $region98: #{tpu_custom_call.1} parent=67 // pred_check_branch
          %566 = sbr.rel (%p564) target = $region100
        $region99: #{tpu_custom_call.1} parent=67 // pred_region
          %567 = dma.done [#allocation15], 512
        $region100: #{tpu_custom_call.1} parent=67 // pred_fallthru
          _
        %s568 = sand.u32 %s48, 1
        %s569 = scalar_lea.sflag [#allocation3], %s568
        %s570 = sand.u32 %s48, 1
        %s571 = smul.addr %s570, 32
        %s572 = scalar_lea.vmem [#allocation2], %s571
        %p573 = pneg %p61
        %p574 = pneg %p58
        %s575 = sand.u32 %s40, 1
        %s576 = scalar_lea.sflag [#allocation6], %s575
        %s577 = sand.u32 %s74, 1
        %s578 = smul.addr %s577, 16
        %s579 = scalar_lea.vmem [#allocation5], %s578
        %p580 = pneg %p87
        %p581 = pneg %p84
        %s582 = sand.u32 %s40, 1
        %s583 = scalar_lea.sflag [#allocation6], %s582
        %s584 = sand.u32 %s100, 1
        %s585 = smul.addr %s584, 16
        %s586 = scalar_lea.vmem [#allocation7], %s585
        %p587 = pneg %p113
        %p588 = pneg %p110
        %p589 = pneg %p134
        %p590 = pneg %p131
        %p591 = pneg %p155
        %p592 = pneg %p152
        %p593 = pneg %p176
        %p594 = pneg %p173
        %p595 = pneg %p197
        %p596 = pneg %p194
        %p597 = pneg %p218
        %p598 = pneg %p215
        %p599 = pneg %p239
        %p600 = pneg %p236
        %p601 = pneg %p260
        %p602 = pneg %p257
        %p603 = pneg %p281
        %p604 = pneg %p278
        %p605 = pneg %p302
        %p606 = pneg %p299
        %p607 = pneg %p328
        %p608 = pneg %p325
        %s609 = sand.u32 %s315, 1
        %s610 = scalar_lea.sflag [#allocation4], %s609
        %s611 = sand.u32 %s315, 1
        %s612 = smul.addr %s611, 32
        %s613 = scalar_lea.vmem [#allocation16], %s612
        %p614 = pneg %p354
        %p615 = pneg %p351
        %s616 = sand.u32 %s341, 1
        %s617 = scalar_lea.sflag [#allocation18], %s616
        %s618 = sand.u32 %s341, 1
        %s619 = smul.addr %s618, 16
        %s620 = scalar_lea.vmem [#allocation17], %s619
        %s621 = smul.u32 2, %s40
        %s622 = smul.u32 2, %s40
        %s623 = smul.u32 2, %s40
        %s624 = smul.u32 2, %s40
        %s625 = smul.u32 2, %s40
        %v626 = vld [vmem:[%s525] sm:$0xff]
        %v627 = vld [vmem:[%s525 + $0x8] sm:$0xff]
        %v628 = vld [vmem:[%s525 + $0x10] sm:$0xff]
        %v629 = vld [vmem:[%s525 + $0x18] sm:$0xff]
        %v630 = vld [vmem:[%s534] sm:$0xff]
        %v631 = vld [vmem:[%s534 + $0x8] sm:$0xff]
        %v632 = vld [vmem:[%s543] sm:$0xff]
        %v633 = vld [vmem:[%s543 + $0x8] sm:$0xff]
        %v634 = vld [vmem:[#allocation10] sm:$0xff]
        %v635 = vld [vmem:[#allocation10 + $0x8] sm:$0xff]
        %v636 = vld [vmem:[#allocation10 + $0x10] sm:$0xff]
        %v637 = vld [vmem:[#allocation10 + $0x18] sm:$0xff]
        %v638 = vld [vmem:[%s5] sm:$0x1]
        %v640 = vlaneseq
        %v641 = vshrl.u32 %v640, 7
        %v642 = vsub.s32 0, %v641
        %v643 = vrot.slane %v638, %v642
        %vm645 = vcmask 261120
        %v647 = vsel %vm645, %v626, 0
        %v650 = vsel %vm645, %v627, 0
        %v653 = vsel %vm645, %v628, 0
        %v656 = vsel %vm645, %v629, 0
        %658 = vmatprep.subr.mxu0 0.0
        %659 = vmatpush1.msra.mxu0 0.0
        %660 = vmatprep.subr.mxu0 0.0
        %661 = vmatpush1.msra.mxu0 0.0
        %662 = vmatprep.subr.mxu0 0.0
        %663 = vmatpush1.msra.mxu0 0.0
        %664 = vmatprep.subr.mxu0 0.0
        %665 = vmatpush1.msra.mxu0 0.0
        %666 = vmatprep.subr.mxu0 0.0
        %667 = vmatpush1.msra.mxu0 0.0
        %668 = vmatprep.subr.mxu0 0.0
        %669 = vmatpush1.msra.mxu0 0.0
        %670 = vmatprep.subr.mxu0 0.0
        %671 = vmatpush1.msra.mxu0 0.0
        %672 = vmatprep.subr.mxu0 0.0
        %673 = vmatpush1.msra.mxu0 0.0
        %674 = vmatprep.subr.mxu0 0.0
        %675 = vmatpush1.msra.mxu0 0.0
        %676 = vmatprep.subr.mxu0 0.0
        %677 = vmatpush1.msra.mxu0 0.0
        %678 = vmatprep.subr.mxu0 0.0
        %679 = vmatpush1.msra.mxu0 0.0
        %680 = vmatprep.subr.mxu0 0.0
        %681 = vmatpush1.msra.mxu0 0.0
        %682 = vmatprep.subr.mxu0 0.0
        %683 = vmatpush1.msra.mxu0 %v637
        %684 = vmatprep.subr.mxu0 0.0
        %685 = vmatpush1.msra.mxu0 %v636
        %686 = vmatprep.subr.mxu0 0.0
        %687 = vmatpush1.msra.mxu0 %v635
        %688 = vmatprep.subr.mxu0 0.0
        %689 = vmatpush1.msra.mxu0 %v634
        %690 = vmatprep.subr.mxu0 0.0
        %691 = vmatpush2.msra.mxu0 0.0
        %692 = vmatprep.subr.mxu0 0.0
        %693 = vmatpush2.msra.mxu0 0.0
        %694 = vmatprep.subr.mxu0 0.0
        %695 = vmatpush2.msra.mxu0 0.0
        %696 = vmatprep.subr.mxu0 0.0
        %697 = vmatpush2.msra.mxu0 0.0
        %698 = vmatprep.subr.mxu0 0.0
        %699 = vmatpush2.msra.mxu0 0.0
        %700 = vmatprep.subr.mxu0 0.0
        %701 = vmatpush2.msra.mxu0 0.0
        %702 = vmatprep.subr.mxu0 0.0
        %703 = vmatpush2.msra.mxu0 0.0
        %704 = vmatprep.subr.mxu0 0.0
        %705 = vmatpush2.msra.mxu0 0.0
        %706 = vmatprep.subr.mxu0 0.0
        %707 = vmatpush2.msra.mxu0 0.0
        %708 = vmatprep.subr.mxu0 0.0
        %709 = vmatpush2.msra.mxu0 0.0
        %710 = vmatprep.subr.mxu0 0.0
        %711 = vmatpush2.msra.mxu0 0.0
        %712 = vmatprep.subr.mxu0 0.0
        %713 = vmatpush2.msra.mxu0 0.0
        %714 = vmatprep.subr.mxu0 0.0
        %715 = vmatpush2.msra.mxu0 0.0
        %716 = vmatprep.subr.mxu0 0.0
        %717 = vmatpush2.msra.mxu0 0.0
        %718 = vmatprep.subr.mxu0 0.0
        %719 = vmatpush2.msra.mxu0 0.0
        %720 = vmatprep.subr.mxu0 0.0
        %721 = vmatpush2.msra.mxu0 0.0
        %722 = vmatprep.mubr.f32.mxu0 0.0
        %723 = vmatmul.mubr.f32.gmra.mxu0 %v647
        %v724 = vpop.f32.mrf.mxu0
        %v725 = vadd.f32 %v643, %v724
        %v726 = vpop.f32.mrf.mxu0
        %727 = vmatprep.mubr.f32.mxu0 0.0
        %728 = vmatmul.mubr.f32.gmra.mxu0 %v650
        %v729 = vpop.f32.mrf.mxu0
        %v730 = vadd.f32 %v643, %v729
        %v731 = vpop.f32.mrf.mxu0
        %732 = vmatprep.mubr.f32.mxu0 0.0
        %733 = vmatmul.mubr.f32.gmra.mxu0 %v653
        %v734 = vpop.f32.mrf.mxu0
        %v735 = vadd.f32 %v643, %v734
        %v736 = vpop.f32.mrf.mxu0
        %737 = vmatprep.mubr.f32.mxu0 0.0
        %738 = vmatmul.mubr.f32.gmra.mxu0 %v656
        %v739 = vpop.f32.mrf.mxu0
        %v740 = vadd.f32 %v643, %v739
        %v741 = vpop.f32.mrf.mxu0
        %742 = vdwg.mxu0
        %v743 = vld [vmem:[#allocation11] sm:$0xff]
        %v744 = vld [vmem:[#allocation11 + $0x8] sm:$0xff]
        %v745 = vld [vmem:[#allocation11 + $0x10] sm:$0xff]
        %v746 = vld [vmem:[#allocation11 + $0x18] sm:$0xff]
        %v747 = vld [vmem:[%s7] sm:$0x1]
        %v749 = vlaneseq
        %v750 = vshrl.u32 %v749, 7
        %v751 = vsub.s32 0, %v750
        %v752 = vrot.slane %v747, %v751
        %v755 = vsel %vm645, %v630, 0
        %v758 = vsel %vm645, %v631, 0
        %760 = vmatprep.subr.mxu0 0.0
        %761 = vmatpush1.msra.mxu0 0.0
        %762 = vmatprep.subr.mxu0 0.0
        %763 = vmatpush1.msra.mxu0 0.0
        %764 = vmatprep.subr.mxu0 0.0
        %765 = vmatpush1.msra.mxu0 0.0
        %766 = vmatprep.subr.mxu0 0.0
        %767 = vmatpush1.msra.mxu0 0.0
        %768 = vmatprep.subr.mxu0 0.0
        %769 = vmatpush1.msra.mxu0 0.0
        %770 = vmatprep.subr.mxu0 0.0
        %771 = vmatpush1.msra.mxu0 0.0
        %772 = vmatprep.subr.mxu0 0.0
        %773 = vmatpush1.msra.mxu0 0.0
        %774 = vmatprep.subr.mxu0 0.0
        %775 = vmatpush1.msra.mxu0 0.0
        %776 = vmatprep.subr.mxu0 0.0
        %777 = vmatpush1.msra.mxu0 0.0
        %778 = vmatprep.subr.mxu0 0.0
        %779 = vmatpush1.msra.mxu0 0.0
        %780 = vmatprep.subr.mxu0 0.0
        %781 = vmatpush1.msra.mxu0 0.0
        %782 = vmatprep.subr.mxu0 0.0
        %783 = vmatpush1.msra.mxu0 0.0
        %784 = vmatprep.subr.mxu0 0.0
        %785 = vmatpush1.msra.mxu0 %v746
        %786 = vmatprep.subr.mxu0 0.0
        %787 = vmatpush1.msra.mxu0 %v745
        %788 = vmatprep.subr.mxu0 0.0
        %789 = vmatpush1.msra.mxu0 %v744
        %790 = vmatprep.subr.mxu0 0.0
        %791 = vmatpush1.msra.mxu0 %v743
        %792 = vmatprep.subr.mxu0 0.0
        %793 = vmatpush2.msra.mxu0 0.0
        %794 = vmatprep.subr.mxu0 0.0
        %795 = vmatpush2.msra.mxu0 0.0
        %796 = vmatprep.subr.mxu0 0.0
        %797 = vmatpush2.msra.mxu0 0.0
        %798 = vmatprep.subr.mxu0 0.0
        %799 = vmatpush2.msra.mxu0 0.0
        %800 = vmatprep.subr.mxu0 0.0
        %801 = vmatpush2.msra.mxu0 0.0
        %802 = vmatprep.subr.mxu0 0.0
        %803 = vmatpush2.msra.mxu0 0.0
        %804 = vmatprep.subr.mxu0 0.0
        %805 = vmatpush2.msra.mxu0 0.0
        %806 = vmatprep.subr.mxu0 0.0
        %807 = vmatpush2.msra.mxu0 0.0
        %808 = vmatprep.subr.mxu0 0.0
        %809 = vmatpush2.msra.mxu0 0.0
        %810 = vmatprep.subr.mxu0 0.0
        %811 = vmatpush2.msra.mxu0 0.0
        %812 = vmatprep.subr.mxu0 0.0
        %813 = vmatpush2.msra.mxu0 0.0
        %814 = vmatprep.subr.mxu0 0.0
        %815 = vmatpush2.msra.mxu0 0.0
        %816 = vmatprep.subr.mxu0 0.0
        %817 = vmatpush2.msra.mxu0 0.0
        %818 = vmatprep.subr.mxu0 0.0
        %819 = vmatpush2.msra.mxu0 0.0
        %820 = vmatprep.subr.mxu0 0.0
        %821 = vmatpush2.msra.mxu0 0.0
        %822 = vmatprep.subr.mxu0 0.0
        %823 = vmatpush2.msra.mxu0 0.0
        %824 = vmatprep.mubr.f32.mxu0 0.0
        %825 = vmatmul.mubr.f32.gmra.mxu0 %v755
        %v826 = vpop.f32.mrf.mxu0
        %v827 = vadd.f32 %v752, %v826
        %v828 = vpop.f32.mrf.mxu0
        %829 = vmatprep.mubr.f32.mxu0 0.0
        %830 = vmatmul.mubr.f32.gmra.mxu0 %v758
        %v831 = vpop.f32.mrf.mxu0
        %v832 = vadd.f32 %v752, %v831
        %v833 = vpop.f32.mrf.mxu0
        %834 = vdwg.mxu0
        %v835 = vld [vmem:[#allocation13] sm:$0xff]
        %v836 = vld [vmem:[#allocation13 + $0x8] sm:$0xff]
        %v837 = vld [vmem:[#allocation13 + $0x10] sm:$0xff]
        %v838 = vld [vmem:[#allocation13 + $0x18] sm:$0xff]
        %v839 = vld [vmem:[%s9] sm:$0x1]
        %v841 = vlaneseq
        %v842 = vshrl.u32 %v841, 7
        %v843 = vsub.s32 0, %v842
        %v844 = vrot.slane %v839, %v843
        %v847 = vsel %vm645, %v632, 0
        %v850 = vsel %vm645, %v633, 0
        %852 = vmatprep.subr.mxu0 0.0
        %853 = vmatpush1.msra.mxu0 0.0
        %854 = vmatprep.subr.mxu0 0.0
        %855 = vmatpush1.msra.mxu0 0.0
        %856 = vmatprep.subr.mxu0 0.0
        %857 = vmatpush1.msra.mxu0 0.0
        %858 = vmatprep.subr.mxu0 0.0
        %859 = vmatpush1.msra.mxu0 0.0
        %860 = vmatprep.subr.mxu0 0.0
        %861 = vmatpush1.msra.mxu0 0.0
        %862 = vmatprep.subr.mxu0 0.0
        %863 = vmatpush1.msra.mxu0 0.0
        %864 = vmatprep.subr.mxu0 0.0
        %865 = vmatpush1.msra.mxu0 0.0
        %866 = vmatprep.subr.mxu0 0.0
        %867 = vmatpush1.msra.mxu0 0.0
        %868 = vmatprep.subr.mxu0 0.0
        %869 = vmatpush1.msra.mxu0 0.0
        %870 = vmatprep.subr.mxu0 0.0
        %871 = vmatpush1.msra.mxu0 0.0
        %872 = vmatprep.subr.mxu0 0.0
        %873 = vmatpush1.msra.mxu0 0.0
        %874 = vmatprep.subr.mxu0 0.0
        %875 = vmatpush1.msra.mxu0 0.0
        %876 = vmatprep.subr.mxu0 0.0
        %877 = vmatpush1.msra.mxu0 %v838
        %878 = vmatprep.subr.mxu0 0.0
        %879 = vmatpush1.msra.mxu0 %v837
        %880 = vmatprep.subr.mxu0 0.0
        %881 = vmatpush1.msra.mxu0 %v836
        %882 = vmatprep.subr.mxu0 0.0
        %883 = vmatpush1.msra.mxu0 %v835
        %884 = vmatprep.subr.mxu0 0.0
        %885 = vmatpush2.msra.mxu0 0.0
        %886 = vmatprep.subr.mxu0 0.0
        %887 = vmatpush2.msra.mxu0 0.0
        %888 = vmatprep.subr.mxu0 0.0
        %889 = vmatpush2.msra.mxu0 0.0
        %890 = vmatprep.subr.mxu0 0.0
        %891 = vmatpush2.msra.mxu0 0.0
        %892 = vmatprep.subr.mxu0 0.0
        %893 = vmatpush2.msra.mxu0 0.0
        %894 = vmatprep.subr.mxu0 0.0
        %895 = vmatpush2.msra.mxu0 0.0
        %896 = vmatprep.subr.mxu0 0.0
        %897 = vmatpush2.msra.mxu0 0.0
        %898 = vmatprep.subr.mxu0 0.0
        %899 = vmatpush2.msra.mxu0 0.0
        %900 = vmatprep.subr.mxu0 0.0
        %901 = vmatpush2.msra.mxu0 0.0
        %902 = vmatprep.subr.mxu0 0.0
        %903 = vmatpush2.msra.mxu0 0.0
        %904 = vmatprep.subr.mxu0 0.0
        %905 = vmatpush2.msra.mxu0 0.0
        %906 = vmatprep.subr.mxu0 0.0
        %907 = vmatpush2.msra.mxu0 0.0
        %908 = vmatprep.subr.mxu0 0.0
        %909 = vmatpush2.msra.mxu0 0.0
        %910 = vmatprep.subr.mxu0 0.0
        %911 = vmatpush2.msra.mxu0 0.0
        %912 = vmatprep.subr.mxu0 0.0
        %913 = vmatpush2.msra.mxu0 0.0
        %914 = vmatprep.subr.mxu0 0.0
        %915 = vmatpush2.msra.mxu0 0.0
        %916 = vmatprep.mubr.f32.mxu0 0.0
        %917 = vmatmul.mubr.f32.gmra.mxu0 %v847
        %v918 = vpop.f32.mrf.mxu0
        %v919 = vadd.f32 %v844, %v918
        %v920 = vpop.f32.mrf.mxu0
        %921 = vmatprep.mubr.f32.mxu0 0.0
        %922 = vmatmul.mubr.f32.gmra.mxu0 %v850
        %v923 = vpop.f32.mrf.mxu0
        %v924 = vadd.f32 %v844, %v923
        %v925 = vpop.f32.mrf.mxu0
        %926 = vdwg.mxu0
        %v927 = vld [vmem:[#allocation8] sm:$0x1]
        %v928 = vld [vmem:[#allocation8 + $0x1] sm:$0x1]
        %v929 = vld [vmem:[#allocation8 + $0x2] sm:$0x1]
        %v930 = vld [vmem:[#allocation8 + $0x3] sm:$0x1]
        %v931 = vld [vmem:[#allocation8 + $0x4] sm:$0x1]
        %v932 = vld [vmem:[#allocation8 + $0x5] sm:$0x1]
        %v933 = vld [vmem:[#allocation8 + $0x6] sm:$0x1]
        %v934 = vld [vmem:[#allocation8 + $0x7] sm:$0x1]
        %v943 = vlaneseq
        %v944 = vshrl.u32 %v943, 7
        %v945 = vsub.s32 0, %v944
        %v946 = vrot.slane %v927, %v945
        %v947 = vlaneseq
        %v948 = vshrl.u32 %v947, 7
        %v949 = vsub.s32 0, %v948
        %v950 = vrot.slane %v928, %v949
        %v951 = vlaneseq
        %v952 = vshrl.u32 %v951, 7
        %v953 = vsub.s32 0, %v952
        %v954 = vrot.slane %v929, %v953
        %v955 = vlaneseq
        %v956 = vshrl.u32 %v955, 7
        %v957 = vsub.s32 0, %v956
        %v958 = vrot.slane %v930, %v957
        %v959 = vlaneseq
        %v960 = vshrl.u32 %v959, 7
        %v961 = vsub.s32 0, %v960
        %v962 = vrot.slane %v931, %v961
        %v963 = vlaneseq
        %v964 = vshrl.u32 %v963, 7
        %v965 = vsub.s32 0, %v964
        %v966 = vrot.slane %v932, %v965
        %v967 = vlaneseq
        %v968 = vshrl.u32 %v967, 7
        %v969 = vsub.s32 0, %v968
        %v970 = vrot.slane %v933, %v969
        %v971 = vlaneseq
        %v972 = vshrl.u32 %v971, 7
        %v973 = vsub.s32 0, %v972
        %v974 = vrot.slane %v934, %v973
        %v983 = vmul.f32 %v725, %v946
        %v984 = vmul.f32 %v730, %v946
        %v985 = vmul.f32 %v725, %v950
        %v986 = vmul.f32 %v730, %v950
        %v987 = vmul.f32 %v725, %v954
        %v988 = vmul.f32 %v730, %v954
        %v989 = vmul.f32 %v725, %v958
        %v990 = vmul.f32 %v730, %v958
        %v991 = vmul.f32 %v725, %v962
        %v992 = vmul.f32 %v730, %v962
        %v993 = vmul.f32 %v725, %v966
        %v994 = vmul.f32 %v730, %v966
        %v995 = vmul.f32 %v725, %v970
        %v996 = vmul.f32 %v730, %v970
        %v997 = vmul.f32 %v725, %v974
        %v998 = vmul.f32 %v730, %v974
        %v1000 = vsel %vm645, %v983, 0
        %v1003 = vsel %vm645, %v984, 0
        %v1006 = vsel %vm645, %v985, 0
        %v1009 = vsel %vm645, %v986, 0
        %v1012 = vsel %vm645, %v987, 0
        %v1015 = vsel %vm645, %v988, 0
        %v1018 = vsel %vm645, %v989, 0
        %v1021 = vsel %vm645, %v990, 0
        %v1024 = vsel %vm645, %v991, 0
        %v1027 = vsel %vm645, %v992, 0
        %v1030 = vsel %vm645, %v993, 0
        %v1033 = vsel %vm645, %v994, 0
        %v1036 = vsel %vm645, %v995, 0
        %v1039 = vsel %vm645, %v996, 0
        %v1042 = vsel %vm645, %v997, 0
        %v1045 = vsel %vm645, %v998, 0
        %v1048 = vsel %vm645, %v827, 0
        %1050 = vmatprep.subr.mxu0 0.0
        %1051 = vmatpush1.xpose.msra.mxu0 0.0
        %1052 = vmatprep.subr.mxu0 0.0
        %1053 = vmatpush1.xpose.msra.mxu0 0.0
        %1054 = vmatprep.subr.mxu0 0.0
        %1055 = vmatpush1.xpose.msra.mxu0 0.0
        %1056 = vmatprep.subr.mxu0 0.0
        %1057 = vmatpush1.xpose.msra.mxu0 0.0
        %1058 = vmatprep.subr.mxu0 0.0
        %1059 = vmatpush1.xpose.msra.mxu0 0.0
        %1060 = vmatprep.subr.mxu0 0.0
        %1061 = vmatpush1.xpose.msra.mxu0 0.0
        %1062 = vmatprep.subr.mxu0 0.0
        %1063 = vmatpush1.xpose.msra.mxu0 0.0
        %1064 = vmatprep.subr.mxu0 0.0
        %1065 = vmatpush1.xpose.msra.mxu0 0.0
        %1066 = vmatprep.subr.mxu0 0.0
        %1067 = vmatpush1.xpose.msra.mxu0 0.0
        %1068 = vmatprep.subr.mxu0 0.0
        %1069 = vmatpush1.xpose.msra.mxu0 0.0
        %1070 = vmatprep.subr.mxu0 0.0
        %1071 = vmatpush1.xpose.msra.mxu0 0.0
        %1072 = vmatprep.subr.mxu0 0.0
        %1073 = vmatpush1.xpose.msra.mxu0 0.0
        %1074 = vmatprep.subr.mxu0 0.0
        %1075 = vmatpush1.xpose.msra.mxu0 0.0
        %1076 = vmatprep.subr.mxu0 0.0
        %1077 = vmatpush1.xpose.msra.mxu0 0.0
        %1078 = vmatprep.subr.mxu0 0.0
        %1079 = vmatpush1.xpose.msra.mxu0 0.0
        %1080 = vmatprep.subr.mxu0 0.0
        %1081 = vmatpush1.xpose.msra.mxu0 %v1048
        %1082 = vmatprep.subr.mxu0 0.0
        %1083 = vmatpush2.xpose.msra.mxu0 0.0
        %1084 = vmatprep.subr.mxu0 0.0
        %1085 = vmatpush2.xpose.msra.mxu0 0.0
        %1086 = vmatprep.subr.mxu0 0.0
        %1087 = vmatpush2.xpose.msra.mxu0 0.0
        %1088 = vmatprep.subr.mxu0 0.0
        %1089 = vmatpush2.xpose.msra.mxu0 0.0
        %1090 = vmatprep.subr.mxu0 0.0
        %1091 = vmatpush2.xpose.msra.mxu0 0.0
        %1092 = vmatprep.subr.mxu0 0.0
        %1093 = vmatpush2.xpose.msra.mxu0 0.0
        %1094 = vmatprep.subr.mxu0 0.0
        %1095 = vmatpush2.xpose.msra.mxu0 0.0
        %1096 = vmatprep.subr.mxu0 0.0
        %1097 = vmatpush2.xpose.msra.mxu0 0.0
        %1098 = vmatprep.subr.mxu0 0.0
        %1099 = vmatpush2.xpose.msra.mxu0 0.0
        %1100 = vmatprep.subr.mxu0 0.0
        %1101 = vmatpush2.xpose.msra.mxu0 0.0
        %1102 = vmatprep.subr.mxu0 0.0
        %1103 = vmatpush2.xpose.msra.mxu0 0.0
        %1104 = vmatprep.subr.mxu0 0.0
        %1105 = vmatpush2.xpose.msra.mxu0 0.0
        %1106 = vmatprep.subr.mxu0 0.0
        %1107 = vmatpush2.xpose.msra.mxu0 0.0
        %1108 = vmatprep.subr.mxu0 0.0
        %1109 = vmatpush2.xpose.msra.mxu0 0.0
        %1110 = vmatprep.subr.mxu0 0.0
        %1111 = vmatpush2.xpose.msra.mxu0 0.0
        %1112 = vmatprep.subr.mxu0 0.0
        %1113 = vmatpush2.xpose.msra.mxu0 0.0
        %1114 = vmatprep.mubr.f32.mxu0 0.0
        %1115 = vmatmul.mubr.f32.gmra.mxu0 %v1000
        %v1116 = vpop.f32.mrf.mxu0
        %v1117 = vadd.f32 0.0, %v1116
        %v1118 = vpop.f32.mrf.mxu0
        %1119 = vmatprep.mubr.f32.mxu0 0.0
        %1120 = vmatmul.mubr.f32.gmra.mxu0 %v1003
        %v1121 = vpop.f32.mrf.mxu0
        %v1122 = vadd.f32 0.0, %v1121
        %v1123 = vpop.f32.mrf.mxu0
        %1124 = vmatprep.mubr.f32.mxu0 0.0
        %1125 = vmatmul.mubr.f32.gmra.mxu0 %v1006
        %v1126 = vpop.f32.mrf.mxu0
        %v1127 = vadd.f32 0.0, %v1126
        %v1128 = vpop.f32.mrf.mxu0
        %1129 = vmatprep.mubr.f32.mxu0 0.0
        %1130 = vmatmul.mubr.f32.gmra.mxu0 %v1009
        %v1131 = vpop.f32.mrf.mxu0
        %v1132 = vadd.f32 0.0, %v1131
        %v1133 = vpop.f32.mrf.mxu0
        %1134 = vmatprep.mubr.f32.mxu0 0.0
        %1135 = vmatmul.mubr.f32.gmra.mxu0 %v1012
        %v1136 = vpop.f32.mrf.mxu0
        %v1137 = vadd.f32 0.0, %v1136
        %v1138 = vpop.f32.mrf.mxu0
        %1139 = vmatprep.mubr.f32.mxu0 0.0
        %1140 = vmatmul.mubr.f32.gmra.mxu0 %v1015
        %v1141 = vpop.f32.mrf.mxu0
        %v1142 = vadd.f32 0.0, %v1141
        %v1143 = vpop.f32.mrf.mxu0
        %1144 = vmatprep.mubr.f32.mxu0 0.0
        %1145 = vmatmul.mubr.f32.gmra.mxu0 %v1018
        %v1146 = vpop.f32.mrf.mxu0
        %v1147 = vadd.f32 0.0, %v1146
        %v1148 = vpop.f32.mrf.mxu0
        %1149 = vmatprep.mubr.f32.mxu0 0.0
        %1150 = vmatmul.mubr.f32.gmra.mxu0 %v1021
        %v1151 = vpop.f32.mrf.mxu0
        %v1152 = vadd.f32 0.0, %v1151
        %v1153 = vpop.f32.mrf.mxu0
        %1154 = vmatprep.mubr.f32.mxu0 0.0
        %1155 = vmatmul.mubr.f32.gmra.mxu0 %v1024
        %v1156 = vpop.f32.mrf.mxu0
        %v1157 = vadd.f32 0.0, %v1156
        %v1158 = vpop.f32.mrf.mxu0
        %1159 = vmatprep.mubr.f32.mxu0 0.0
        %1160 = vmatmul.mubr.f32.gmra.mxu0 %v1027
        %v1161 = vpop.f32.mrf.mxu0
        %v1162 = vadd.f32 0.0, %v1161
        %v1163 = vpop.f32.mrf.mxu0
        %1164 = vmatprep.mubr.f32.mxu0 0.0
        %1165 = vmatmul.mubr.f32.gmra.mxu0 %v1030
        %v1166 = vpop.f32.mrf.mxu0
        %v1167 = vadd.f32 0.0, %v1166
        %v1168 = vpop.f32.mrf.mxu0
        %1169 = vmatprep.mubr.f32.mxu0 0.0
        %1170 = vmatmul.mubr.f32.gmra.mxu0 %v1033
        %v1171 = vpop.f32.mrf.mxu0
        %v1172 = vadd.f32 0.0, %v1171
        %v1173 = vpop.f32.mrf.mxu0
        %1174 = vmatprep.mubr.f32.mxu0 0.0
        %1175 = vmatmul.mubr.f32.gmra.mxu0 %v1036
        %v1176 = vpop.f32.mrf.mxu0
        %v1177 = vadd.f32 0.0, %v1176
        %v1178 = vpop.f32.mrf.mxu0
        %1179 = vmatprep.mubr.f32.mxu0 0.0
        %1180 = vmatmul.mubr.f32.gmra.mxu0 %v1039
        %v1181 = vpop.f32.mrf.mxu0
        %v1182 = vadd.f32 0.0, %v1181
        %v1183 = vpop.f32.mrf.mxu0
        %1184 = vmatprep.mubr.f32.mxu0 0.0
        %1185 = vmatmul.mubr.f32.gmra.mxu0 %v1042
        %v1186 = vpop.f32.mrf.mxu0
        %v1187 = vadd.f32 0.0, %v1186
        %v1188 = vpop.f32.mrf.mxu0
        %1189 = vmatprep.mubr.f32.mxu0 0.0
        %1190 = vmatmul.mubr.f32.gmra.mxu0 %v1045
        %v1191 = vpop.f32.mrf.mxu0
        %v1192 = vadd.f32 0.0, %v1191
        %v1193 = vpop.f32.mrf.mxu0
        %1194 = vdwg.mxu0
        %vm1195 = vcmask 64512
        %v1196 = vsel %vm1195, %v1117, -inf
        %1197 = vmax.xlane.f32.xlu0 %v1196
        %v1198 = vpop.xlane.xlu0 %1197
        %v1199 = vsel %vm1195, %v1122, -inf
        %1200 = vmax.xlane.f32.xlu0 %v1199
        %v1201 = vpop.xlane.xlu0 %1200
        %v1202 = vsel %vm1195, %v1127, -inf
        %1203 = vmax.xlane.f32.xlu0 %v1202
        %v1204 = vpop.xlane.xlu0 %1203
        %v1205 = vsel %vm1195, %v1132, -inf
        %1206 = vmax.xlane.f32.xlu0 %v1205
        %v1207 = vpop.xlane.xlu0 %1206
        %v1208 = vsel %vm1195, %v1137, -inf
        %1209 = vmax.xlane.f32.xlu0 %v1208
        %v1210 = vpop.xlane.xlu0 %1209
        %v1211 = vsel %vm1195, %v1142, -inf
        %1212 = vmax.xlane.f32.xlu0 %v1211
        %v1213 = vpop.xlane.xlu0 %1212
        %v1214 = vsel %vm1195, %v1147, -inf
        %1215 = vmax.xlane.f32.xlu0 %v1214
        %v1216 = vpop.xlane.xlu0 %1215
        %v1217 = vsel %vm1195, %v1152, -inf
        %1218 = vmax.xlane.f32.xlu0 %v1217
        %v1219 = vpop.xlane.xlu0 %1218
        %v1220 = vsel %vm1195, %v1157, -inf
        %1221 = vmax.xlane.f32.xlu0 %v1220
        %v1222 = vpop.xlane.xlu0 %1221
        %v1223 = vsel %vm1195, %v1162, -inf
        %1224 = vmax.xlane.f32.xlu0 %v1223
        %v1225 = vpop.xlane.xlu0 %1224
        %v1226 = vsel %vm1195, %v1167, -inf
        %1227 = vmax.xlane.f32.xlu0 %v1226
        %v1228 = vpop.xlane.xlu0 %1227
        %v1229 = vsel %vm1195, %v1172, -inf
        %1230 = vmax.xlane.f32.xlu0 %v1229
        %v1231 = vpop.xlane.xlu0 %1230
        %v1232 = vsel %vm1195, %v1177, -inf
        %1233 = vmax.xlane.f32.xlu0 %v1232
        %v1234 = vpop.xlane.xlu0 %1233
        %v1235 = vsel %vm1195, %v1182, -inf
        %1236 = vmax.xlane.f32.xlu0 %v1235
        %v1237 = vpop.xlane.xlu0 %1236
        %v1238 = vsel %vm1195, %v1187, -inf
        %1239 = vmax.xlane.f32.xlu0 %v1238
        %v1240 = vpop.xlane.xlu0 %1239
        %v1241 = vsel %vm1195, %v1192, -inf
        %1242 = vmax.xlane.f32.xlu0 %v1241
        %v1243 = vpop.xlane.xlu0 %1242
        %v1244 = vsub.f32 %v1117, %v1198
        %v1245 = vsub.f32 %v1122, %v1201
        %v1246 = vsub.f32 %v1127, %v1204
        %v1247 = vsub.f32 %v1132, %v1207
        %v1248 = vsub.f32 %v1137, %v1210
        %v1249 = vsub.f32 %v1142, %v1213
        %v1250 = vsub.f32 %v1147, %v1216
        %v1251 = vsub.f32 %v1152, %v1219
        %v1252 = vsub.f32 %v1157, %v1222
        %v1253 = vsub.f32 %v1162, %v1225
        %v1254 = vsub.f32 %v1167, %v1228
        %v1255 = vsub.f32 %v1172, %v1231
        %v1256 = vsub.f32 %v1177, %v1234
        %v1257 = vsub.f32 %v1182, %v1237
        %v1258 = vsub.f32 %v1187, %v1240
        %v1259 = vsub.f32 %v1192, %v1243
        %v1260 = vmul.f32 %v1244, 1.442695
        %v1261 = vpow.pop %v1260
        %v1262 = vmul.f32 %v1245, 1.442695
        %v1263 = vpow.pop %v1262
        %v1264 = vmul.f32 %v1246, 1.442695
        %v1265 = vpow.pop %v1264
        %v1266 = vmul.f32 %v1247, 1.442695
        %v1267 = vpow.pop %v1266
        %v1268 = vmul.f32 %v1248, 1.442695
        %v1269 = vpow.pop %v1268
        %v1270 = vmul.f32 %v1249, 1.442695
        %v1271 = vpow.pop %v1270
        %v1272 = vmul.f32 %v1250, 1.442695
        %v1273 = vpow.pop %v1272
        %v1274 = vmul.f32 %v1251, 1.442695
        %v1275 = vpow.pop %v1274
        %v1276 = vmul.f32 %v1252, 1.442695
        %v1277 = vpow.pop %v1276
        %v1278 = vmul.f32 %v1253, 1.442695
        %v1279 = vpow.pop %v1278
        %v1280 = vmul.f32 %v1254, 1.442695
        %v1281 = vpow.pop %v1280
        %v1282 = vmul.f32 %v1255, 1.442695
        %v1283 = vpow.pop %v1282
        %v1284 = vmul.f32 %v1256, 1.442695
        %v1285 = vpow.pop %v1284
        %v1286 = vmul.f32 %v1257, 1.442695
        %v1287 = vpow.pop %v1286
        %v1288 = vmul.f32 %v1258, 1.442695
        %v1289 = vpow.pop %v1288
        %v1290 = vmul.f32 %v1259, 1.442695
        %v1291 = vpow.pop %v1290
        %v1292 = vsel %vm1195, %v1261, 0.0
        %1293 = vadd.xlane.f32.xlu0 %v1292
        %v1294 = vpop.xlane.xlu0 %1293
        %v1295 = vsel %vm1195, %v1263, 0.0
        %1296 = vadd.xlane.f32.xlu0 %v1295
        %v1297 = vpop.xlane.xlu0 %1296
        %v1298 = vsel %vm1195, %v1265, 0.0
        %1299 = vadd.xlane.f32.xlu0 %v1298
        %v1300 = vpop.xlane.xlu0 %1299
        %v1301 = vsel %vm1195, %v1267, 0.0
        %1302 = vadd.xlane.f32.xlu0 %v1301
        %v1303 = vpop.xlane.xlu0 %1302
        %v1304 = vsel %vm1195, %v1269, 0.0
        %1305 = vadd.xlane.f32.xlu0 %v1304
        %v1306 = vpop.xlane.xlu0 %1305
        %v1307 = vsel %vm1195, %v1271, 0.0
        %1308 = vadd.xlane.f32.xlu0 %v1307
        %v1309 = vpop.xlane.xlu0 %1308
        %v1310 = vsel %vm1195, %v1273, 0.0
        %1311 = vadd.xlane.f32.xlu0 %v1310
        %v1312 = vpop.xlane.xlu0 %1311
        %v1313 = vsel %vm1195, %v1275, 0.0
        %1314 = vadd.xlane.f32.xlu0 %v1313
        %v1315 = vpop.xlane.xlu0 %1314
        %v1316 = vsel %vm1195, %v1277, 0.0
        %1317 = vadd.xlane.f32.xlu0 %v1316
        %v1318 = vpop.xlane.xlu0 %1317
        %v1319 = vsel %vm1195, %v1279, 0.0
        %1320 = vadd.xlane.f32.xlu0 %v1319
        %v1321 = vpop.xlane.xlu0 %1320
        %v1322 = vsel %vm1195, %v1281, 0.0
        %1323 = vadd.xlane.f32.xlu0 %v1322
        %v1324 = vpop.xlane.xlu0 %1323
        %v1325 = vsel %vm1195, %v1283, 0.0
        %1326 = vadd.xlane.f32.xlu0 %v1325
        %v1327 = vpop.xlane.xlu0 %1326
        %v1328 = vsel %vm1195, %v1285, 0.0
        %1329 = vadd.xlane.f32.xlu0 %v1328
        %v1330 = vpop.xlane.xlu0 %1329
        %v1331 = vsel %vm1195, %v1287, 0.0
        %1332 = vadd.xlane.f32.xlu0 %v1331
        %v1333 = vpop.xlane.xlu0 %1332
        %v1334 = vsel %vm1195, %v1289, 0.0
        %1335 = vadd.xlane.f32.xlu0 %v1334
        %v1336 = vpop.xlane.xlu0 %1335
        %v1337 = vsel %vm1195, %v1291, 0.0
        %1338 = vadd.xlane.f32.xlu0 %v1337
        %v1339 = vpop.xlane.xlu0 %1338
        %v1340 = vrcp.pop %v1294
        %v1341 = vmul.f32 %v1261, %v1340
        %v1342 = vrcp.pop %v1297
        %v1343 = vmul.f32 %v1263, %v1342
        %v1344 = vrcp.pop %v1300
        %v1345 = vmul.f32 %v1265, %v1344
        %v1346 = vrcp.pop %v1303
        %v1347 = vmul.f32 %v1267, %v1346
        %v1348 = vrcp.pop %v1306
        %v1349 = vmul.f32 %v1269, %v1348
        %v1350 = vrcp.pop %v1309
        %v1351 = vmul.f32 %v1271, %v1350
        %v1352 = vrcp.pop %v1312
        %v1353 = vmul.f32 %v1273, %v1352
        %v1354 = vrcp.pop %v1315
        %v1355 = vmul.f32 %v1275, %v1354
        %v1356 = vrcp.pop %v1318
        %v1357 = vmul.f32 %v1277, %v1356
        %v1358 = vrcp.pop %v1321
        %v1359 = vmul.f32 %v1279, %v1358
        %v1360 = vrcp.pop %v1324
        %v1361 = vmul.f32 %v1281, %v1360
        %v1362 = vrcp.pop %v1327
        %v1363 = vmul.f32 %v1283, %v1362
        %v1364 = vrcp.pop %v1330
        %v1365 = vmul.f32 %v1285, %v1364
        %v1366 = vrcp.pop %v1333
        %v1367 = vmul.f32 %v1287, %v1366
        %v1368 = vrcp.pop %v1336
        %v1369 = vmul.f32 %v1289, %v1368
        %v1370 = vrcp.pop %v1339
        %v1371 = vmul.f32 %v1291, %v1370
        %1372 = vxpose.xlu0.b32.start [1/16] %v1341, 128
        %1373 = vxpose.xlu0.b32.cont [2/16] %v1343, 128
        %1374 = vxpose.xlu0.b32.cont [3/16] %v1345, 128
        %1375 = vxpose.xlu0.b32.cont [4/16] %v1347, 128
        %1376 = vxpose.xlu0.b32.cont [5/16] %v1349, 128
        %1377 = vxpose.xlu0.b32.cont [6/16] %v1351, 128
        %1378 = vxpose.xlu0.b32.cont [7/16] %v1353, 128
        %1379 = vxpose.xlu0.b32.cont [8/16] %v1355, 128
        %1380 = vxpose.xlu0.b32.cont [9/16] %v1357, 128
        %1381 = vxpose.xlu0.b32.cont [10/16] %v1359, 128
        %1382 = vxpose.xlu0.b32.cont [11/16] %v1361, 128
        %1383 = vxpose.xlu0.b32.cont [12/16] %v1363, 128
        %1384 = vxpose.xlu0.b32.cont [13/16] %v1365, 128
        %1385 = vxpose.xlu0.b32.cont [14/16] %v1367, 128
        %1386 = vxpose.xlu0.b32.cont [15/16] %v1369, 128
        %1387 = vxpose.xlu0.b32.end [16/16] %v1371, 128
        %v1388 = vpop.trf.xlu0
        %v1389 = vpop.trf.xlu0
        %v1390 = vpop.trf.xlu0
        %v1391 = vpop.trf.xlu0
        %v1392 = vpop.trf.xlu0
        %v1393 = vpop.trf.xlu0
        %v1394 = vpop.trf.xlu0
        %v1395 = vpop.trf.xlu0
        %v1396 = vpop.trf.xlu0
        %v1397 = vpop.trf.xlu0
        %v1398 = vpop.trf.xlu0
        %v1399 = vpop.trf.xlu0
        %v1400 = vpop.trf.xlu0
        %v1401 = vpop.trf.xlu0
        %v1402 = vpop.trf.xlu0
        %v1403 = vpop.trf.xlu0
        %1404 = vst [vmem:[%s620] sm:$0xff] %v1388
        %v1406 = vsel %vm1195, %v1341, 0
        %v1409 = vsel %vm1195, %v1343, 0
        %v1412 = vsel %vm1195, %v1345, 0
        %v1415 = vsel %vm1195, %v1347, 0
        %v1418 = vsel %vm1195, %v1349, 0
        %v1421 = vsel %vm1195, %v1351, 0
        %v1424 = vsel %vm1195, %v1353, 0
        %v1427 = vsel %vm1195, %v1355, 0
        %v1430 = vsel %vm1195, %v1357, 0
        %v1433 = vsel %vm1195, %v1359, 0
        %v1436 = vsel %vm1195, %v1361, 0
        %v1439 = vsel %vm1195, %v1363, 0
        %v1442 = vsel %vm1195, %v1365, 0
        %v1445 = vsel %vm1195, %v1367, 0
        %v1448 = vsel %vm1195, %v1369, 0
        %v1451 = vsel %vm1195, %v1371, 0
        %1453 = vmatprep.subr.mxu0 0.0
        %1454 = vmatpush1.msra.mxu0 0.0
        %1455 = vmatprep.subr.mxu0 0.0
        %1456 = vmatpush1.msra.mxu0 0.0
        %1457 = vmatprep.subr.mxu0 0.0
        %1458 = vmatpush1.msra.mxu0 0.0
        %1459 = vmatprep.subr.mxu0 0.0
        %1460 = vmatpush1.msra.mxu0 0.0
        %1461 = vmatprep.subr.mxu0 0.0
        %1462 = vmatpush1.msra.mxu0 0.0
        %1463 = vmatprep.subr.mxu0 0.0
        %1464 = vmatpush1.msra.mxu0 0.0
        %1465 = vmatprep.subr.mxu0 0.0
        %1466 = vmatpush1.msra.mxu0 0.0
        %1467 = vmatprep.subr.mxu0 0.0
        %1468 = vmatpush1.msra.mxu0 0.0
        %1469 = vmatprep.subr.mxu0 0.0
        %1470 = vmatpush1.msra.mxu0 0.0
        %1471 = vmatprep.subr.mxu0 0.0
        %1472 = vmatpush1.msra.mxu0 0.0
        %1473 = vmatprep.subr.mxu0 0.0
        %1474 = vmatpush1.msra.mxu0 0.0
        %1475 = vmatprep.subr.mxu0 0.0
        %1476 = vmatpush1.msra.mxu0 0.0
        %1477 = vmatprep.subr.mxu0 0.0
        %1478 = vmatpush1.msra.mxu0 0.0
        %1479 = vmatprep.subr.mxu0 0.0
        %1480 = vmatpush1.msra.mxu0 0.0
        %1481 = vmatprep.subr.mxu0 0.0
        %1482 = vmatpush1.msra.mxu0 0.0
        %1483 = vmatprep.subr.mxu0 0.0
        %1484 = vmatpush1.msra.mxu0 %v919
        %1485 = vmatprep.subr.mxu0 0.0
        %1486 = vmatpush2.msra.mxu0 0.0
        %1487 = vmatprep.subr.mxu0 0.0
        %1488 = vmatpush2.msra.mxu0 0.0
        %1489 = vmatprep.subr.mxu0 0.0
        %1490 = vmatpush2.msra.mxu0 0.0
        %1491 = vmatprep.subr.mxu0 0.0
        %1492 = vmatpush2.msra.mxu0 0.0
        %1493 = vmatprep.subr.mxu0 0.0
        %1494 = vmatpush2.msra.mxu0 0.0
        %1495 = vmatprep.subr.mxu0 0.0
        %1496 = vmatpush2.msra.mxu0 0.0
        %1497 = vmatprep.subr.mxu0 0.0
        %1498 = vmatpush2.msra.mxu0 0.0
        %1499 = vmatprep.subr.mxu0 0.0
        %1500 = vmatpush2.msra.mxu0 0.0
        %1501 = vmatprep.subr.mxu0 0.0
        %1502 = vmatpush2.msra.mxu0 0.0
        %1503 = vmatprep.subr.mxu0 0.0
        %1504 = vmatpush2.msra.mxu0 0.0
        %1505 = vmatprep.subr.mxu0 0.0
        %1506 = vmatpush2.msra.mxu0 0.0
        %1507 = vmatprep.subr.mxu0 0.0
        %1508 = vmatpush2.msra.mxu0 0.0
        %1509 = vmatprep.subr.mxu0 0.0
        %1510 = vmatpush2.msra.mxu0 0.0
        %1511 = vmatprep.subr.mxu0 0.0
        %1512 = vmatpush2.msra.mxu0 0.0
        %1513 = vmatprep.subr.mxu0 0.0
        %1514 = vmatpush2.msra.mxu0 0.0
        %1515 = vmatprep.subr.mxu0 0.0
        %1516 = vmatpush2.msra.mxu0 0.0
        %1517 = vmatprep.mubr.f32.mxu0 0.0
        %1518 = vmatmul.mubr.f32.gmra.mxu0 %v1406
        %v1519 = vpop.f32.mrf.mxu0
        %v1520 = vadd.f32 0.0, %v1519
        %v1521 = vpop.f32.mrf.mxu0
        %1522 = vmatprep.mubr.f32.mxu0 0.0
        %1523 = vmatmul.mubr.f32.gmra.mxu0 %v1409
        %v1524 = vpop.f32.mrf.mxu0
        %v1525 = vadd.f32 0.0, %v1524
        %v1526 = vpop.f32.mrf.mxu0
        %1527 = vmatprep.mubr.f32.mxu0 0.0
        %1528 = vmatmul.mubr.f32.gmra.mxu0 %v1412
        %v1529 = vpop.f32.mrf.mxu0
        %v1530 = vadd.f32 0.0, %v1529
        %v1531 = vpop.f32.mrf.mxu0
        %1532 = vmatprep.mubr.f32.mxu0 0.0
        %1533 = vmatmul.mubr.f32.gmra.mxu0 %v1415
        %v1534 = vpop.f32.mrf.mxu0
        %v1535 = vadd.f32 0.0, %v1534
        %v1536 = vpop.f32.mrf.mxu0
        %1537 = vmatprep.mubr.f32.mxu0 0.0
        %1538 = vmatmul.mubr.f32.gmra.mxu0 %v1418
        %v1539 = vpop.f32.mrf.mxu0
        %v1540 = vadd.f32 0.0, %v1539
        %v1541 = vpop.f32.mrf.mxu0
        %1542 = vmatprep.mubr.f32.mxu0 0.0
        %1543 = vmatmul.mubr.f32.gmra.mxu0 %v1421
        %v1544 = vpop.f32.mrf.mxu0
        %v1545 = vadd.f32 0.0, %v1544
        %v1546 = vpop.f32.mrf.mxu0
        %1547 = vmatprep.mubr.f32.mxu0 0.0
        %1548 = vmatmul.mubr.f32.gmra.mxu0 %v1424
        %v1549 = vpop.f32.mrf.mxu0
        %v1550 = vadd.f32 0.0, %v1549
        %v1551 = vpop.f32.mrf.mxu0
        %1552 = vmatprep.mubr.f32.mxu0 0.0
        %1553 = vmatmul.mubr.f32.gmra.mxu0 %v1427
        %v1554 = vpop.f32.mrf.mxu0
        %v1555 = vadd.f32 0.0, %v1554
        %v1556 = vpop.f32.mrf.mxu0
        %1557 = vmatprep.mubr.f32.mxu0 0.0
        %1558 = vmatmul.mubr.f32.gmra.mxu0 %v1430
        %v1559 = vpop.f32.mrf.mxu0
        %v1560 = vadd.f32 0.0, %v1559
        %v1561 = vpop.f32.mrf.mxu0
        %1562 = vmatprep.mubr.f32.mxu0 0.0
        %1563 = vmatmul.mubr.f32.gmra.mxu0 %v1433
        %v1564 = vpop.f32.mrf.mxu0
        %v1565 = vadd.f32 0.0, %v1564
        %v1566 = vpop.f32.mrf.mxu0
        %1567 = vmatprep.mubr.f32.mxu0 0.0
        %1568 = vmatmul.mubr.f32.gmra.mxu0 %v1436
        %v1569 = vpop.f32.mrf.mxu0
        %v1570 = vadd.f32 0.0, %v1569
        %v1571 = vpop.f32.mrf.mxu0
        %1572 = vmatprep.mubr.f32.mxu0 0.0
        %1573 = vmatmul.mubr.f32.gmra.mxu0 %v1439
        %v1574 = vpop.f32.mrf.mxu0
        %v1575 = vadd.f32 0.0, %v1574
        %v1576 = vpop.f32.mrf.mxu0
        %1577 = vmatprep.mubr.f32.mxu0 0.0
        %1578 = vmatmul.mubr.f32.gmra.mxu0 %v1442
        %v1579 = vpop.f32.mrf.mxu0
        %v1580 = vadd.f32 0.0, %v1579
        %v1581 = vpop.f32.mrf.mxu0
        %1582 = vmatprep.mubr.f32.mxu0 0.0
        %1583 = vmatmul.mubr.f32.gmra.mxu0 %v1445
        %v1584 = vpop.f32.mrf.mxu0
        %v1585 = vadd.f32 0.0, %v1584
        %v1586 = vpop.f32.mrf.mxu0
        %1587 = vmatprep.mubr.f32.mxu0 0.0
        %1588 = vmatmul.mubr.f32.gmra.mxu0 %v1448
        %v1589 = vpop.f32.mrf.mxu0
        %v1590 = vadd.f32 0.0, %v1589
        %v1591 = vpop.f32.mrf.mxu0
        %1592 = vmatprep.mubr.f32.mxu0 0.0
        %1593 = vmatmul.mubr.f32.gmra.mxu0 %v1451
        %v1594 = vpop.f32.mrf.mxu0
        %v1595 = vadd.f32 0.0, %v1594
        %v1596 = vpop.f32.mrf.mxu0
        %1597 = vdwg.mxu0
        %v1598 = vmul.f32 %v1520, %v946
        %v1599 = vmul.f32 %v1525, %v946
        %v1600 = vmul.f32 %v1530, %v950
        %v1601 = vmul.f32 %v1535, %v950
        %v1602 = vmul.f32 %v1540, %v954
        %v1603 = vmul.f32 %v1545, %v954
        %v1604 = vmul.f32 %v1550, %v958
        %v1605 = vmul.f32 %v1555, %v958
        %v1606 = vmul.f32 %v1560, %v962
        %v1607 = vmul.f32 %v1565, %v962
        %v1608 = vmul.f32 %v1570, %v966
        %v1609 = vmul.f32 %v1575, %v966
        %v1610 = vmul.f32 %v1580, %v970
        %v1611 = vmul.f32 %v1585, %v970
        %v1612 = vmul.f32 %v1590, %v974
        %v1613 = vmul.f32 %v1595, %v974
        %v1614 = vsel %vm645, %v1598, 0.0
        %v1615 = vsel %vm645, %v1600, 0.0
        %v1616 = vadd.f32 %v1614, %v1615
        %v1617 = vsel %vm645, %v1602, 0.0
        %v1618 = vadd.f32 %v1616, %v1617
        %v1619 = vsel %vm645, %v1604, 0.0
        %v1620 = vadd.f32 %v1618, %v1619
        %v1621 = vsel %vm645, %v1606, 0.0
        %v1622 = vadd.f32 %v1620, %v1621
        %v1623 = vsel %vm645, %v1608, 0.0
        %v1624 = vadd.f32 %v1622, %v1623
        %v1625 = vsel %vm645, %v1610, 0.0
        %v1626 = vadd.f32 %v1624, %v1625
        %v1627 = vsel %vm645, %v1612, 0.0
        %v1628 = vadd.f32 %v1626, %v1627
        %v1629 = vsel %vm645, %v1599, 0.0
        %v1630 = vsel %vm645, %v1601, 0.0
        %v1631 = vadd.f32 %v1629, %v1630
        %v1632 = vsel %vm645, %v1603, 0.0
        %v1633 = vadd.f32 %v1631, %v1632
        %v1634 = vsel %vm645, %v1605, 0.0
        %v1635 = vadd.f32 %v1633, %v1634
        %v1636 = vsel %vm645, %v1607, 0.0
        %v1637 = vadd.f32 %v1635, %v1636
        %v1638 = vsel %vm645, %v1609, 0.0
        %v1639 = vadd.f32 %v1637, %v1638
        %v1640 = vsel %vm645, %v1611, 0.0
        %v1641 = vadd.f32 %v1639, %v1640
        %v1642 = vsel %vm645, %v1613, 0.0
        %v1643 = vadd.f32 %v1641, %v1642
        %v1644 = vmul.f32 %v735, %v946
        %v1645 = vmul.f32 %v740, %v946
        %v1646 = vmul.f32 %v735, %v950
        %v1647 = vmul.f32 %v740, %v950
        %v1648 = vmul.f32 %v735, %v954
        %v1649 = vmul.f32 %v740, %v954
        %v1650 = vmul.f32 %v735, %v958
        %v1651 = vmul.f32 %v740, %v958
        %v1652 = vmul.f32 %v735, %v962
        %v1653 = vmul.f32 %v740, %v962
        %v1654 = vmul.f32 %v735, %v966
        %v1655 = vmul.f32 %v740, %v966
        %v1656 = vmul.f32 %v735, %v970
        %v1657 = vmul.f32 %v740, %v970
        %v1658 = vmul.f32 %v735, %v974
        %v1659 = vmul.f32 %v740, %v974
        %v1661 = vsel %vm645, %v1644, 0
        %v1664 = vsel %vm645, %v1645, 0
        %v1667 = vsel %vm645, %v1646, 0
        %v1670 = vsel %vm645, %v1647, 0
        %v1673 = vsel %vm645, %v1648, 0
        %v1676 = vsel %vm645, %v1649, 0
        %v1679 = vsel %vm645, %v1650, 0
        %v1682 = vsel %vm645, %v1651, 0
        %v1685 = vsel %vm645, %v1652, 0
        %v1688 = vsel %vm645, %v1653, 0
        %v1691 = vsel %vm645, %v1654, 0
        %v1694 = vsel %vm645, %v1655, 0
        %v1697 = vsel %vm645, %v1656, 0
        %v1700 = vsel %vm645, %v1657, 0
        %v1703 = vsel %vm645, %v1658, 0
        %v1706 = vsel %vm645, %v1659, 0
        %v1709 = vsel %vm645, %v832, 0
        %1711 = vmatprep.subr.mxu0 0.0
        %1712 = vmatpush1.xpose.msra.mxu0 0.0
        %1713 = vmatprep.subr.mxu0 0.0
        %1714 = vmatpush1.xpose.msra.mxu0 0.0
        %1715 = vmatprep.subr.mxu0 0.0
        %1716 = vmatpush1.xpose.msra.mxu0 0.0
        %1717 = vmatprep.subr.mxu0 0.0
        %1718 = vmatpush1.xpose.msra.mxu0 0.0
        %1719 = vmatprep.subr.mxu0 0.0
        %1720 = vmatpush1.xpose.msra.mxu0 0.0
        %1721 = vmatprep.subr.mxu0 0.0
        %1722 = vmatpush1.xpose.msra.mxu0 0.0
        %1723 = vmatprep.subr.mxu0 0.0
        %1724 = vmatpush1.xpose.msra.mxu0 0.0
        %1725 = vmatprep.subr.mxu0 0.0
        %1726 = vmatpush1.xpose.msra.mxu0 0.0
        %1727 = vmatprep.subr.mxu0 0.0
        %1728 = vmatpush1.xpose.msra.mxu0 0.0
        %1729 = vmatprep.subr.mxu0 0.0
        %1730 = vmatpush1.xpose.msra.mxu0 0.0
        %1731 = vmatprep.subr.mxu0 0.0
        %1732 = vmatpush1.xpose.msra.mxu0 0.0
        %1733 = vmatprep.subr.mxu0 0.0
        %1734 = vmatpush1.xpose.msra.mxu0 0.0
        %1735 = vmatprep.subr.mxu0 0.0
        %1736 = vmatpush1.xpose.msra.mxu0 0.0
        %1737 = vmatprep.subr.mxu0 0.0
        %1738 = vmatpush1.xpose.msra.mxu0 0.0
        %1739 = vmatprep.subr.mxu0 0.0
        %1740 = vmatpush1.xpose.msra.mxu0 0.0
        %1741 = vmatprep.subr.mxu0 0.0
        %1742 = vmatpush1.xpose.msra.mxu0 %v1709
        %1743 = vmatprep.subr.mxu0 0.0
        %1744 = vmatpush2.xpose.msra.mxu0 0.0
        %1745 = vmatprep.subr.mxu0 0.0
        %1746 = vmatpush2.xpose.msra.mxu0 0.0
        %1747 = vmatprep.subr.mxu0 0.0
        %1748 = vmatpush2.xpose.msra.mxu0 0.0
        %1749 = vmatprep.subr.mxu0 0.0
        %1750 = vmatpush2.xpose.msra.mxu0 0.0
        %1751 = vmatprep.subr.mxu0 0.0
        %1752 = vmatpush2.xpose.msra.mxu0 0.0
        %1753 = vmatprep.subr.mxu0 0.0
        %1754 = vmatpush2.xpose.msra.mxu0 0.0
        %1755 = vmatprep.subr.mxu0 0.0
        %1756 = vmatpush2.xpose.msra.mxu0 0.0
        %1757 = vmatprep.subr.mxu0 0.0
        %1758 = vmatpush2.xpose.msra.mxu0 0.0
        %1759 = vmatprep.subr.mxu0 0.0
        %1760 = vmatpush2.xpose.msra.mxu0 0.0
        %1761 = vmatprep.subr.mxu0 0.0
        %1762 = vmatpush2.xpose.msra.mxu0 0.0
        %1763 = vmatprep.subr.mxu0 0.0
        %1764 = vmatpush2.xpose.msra.mxu0 0.0
        %1765 = vmatprep.subr.mxu0 0.0
        %1766 = vmatpush2.xpose.msra.mxu0 0.0
        %1767 = vmatprep.subr.mxu0 0.0
        %1768 = vmatpush2.xpose.msra.mxu0 0.0
        %1769 = vmatprep.subr.mxu0 0.0
        %1770 = vmatpush2.xpose.msra.mxu0 0.0
        %1771 = vmatprep.subr.mxu0 0.0
        %1772 = vmatpush2.xpose.msra.mxu0 0.0
        %1773 = vmatprep.subr.mxu0 0.0
        %1774 = vmatpush2.xpose.msra.mxu0 0.0
        %1775 = vmatprep.mubr.f32.mxu0 0.0
        %1776 = vmatmul.mubr.f32.gmra.mxu0 %v1661
        %v1777 = vpop.f32.mrf.mxu0
        %v1778 = vadd.f32 0.0, %v1777
        %v1779 = vpop.f32.mrf.mxu0
        %1780 = vmatprep.mubr.f32.mxu0 0.0
        %1781 = vmatmul.mubr.f32.gmra.mxu0 %v1664
        %v1782 = vpop.f32.mrf.mxu0
        %v1783 = vadd.f32 0.0, %v1782
        %v1784 = vpop.f32.mrf.mxu0
        %1785 = vmatprep.mubr.f32.mxu0 0.0
        %1786 = vmatmul.mubr.f32.gmra.mxu0 %v1667
        %v1787 = vpop.f32.mrf.mxu0
        %v1788 = vadd.f32 0.0, %v1787
        %v1789 = vpop.f32.mrf.mxu0
        %1790 = vmatprep.mubr.f32.mxu0 0.0
        %1791 = vmatmul.mubr.f32.gmra.mxu0 %v1670
        %v1792 = vpop.f32.mrf.mxu0
        %v1793 = vadd.f32 0.0, %v1792
        %v1794 = vpop.f32.mrf.mxu0
        %1795 = vmatprep.mubr.f32.mxu0 0.0
        %1796 = vmatmul.mubr.f32.gmra.mxu0 %v1673
        %v1797 = vpop.f32.mrf.mxu0
        %v1798 = vadd.f32 0.0, %v1797
        %v1799 = vpop.f32.mrf.mxu0
        %1800 = vmatprep.mubr.f32.mxu0 0.0
        %1801 = vmatmul.mubr.f32.gmra.mxu0 %v1676
        %v1802 = vpop.f32.mrf.mxu0
        %v1803 = vadd.f32 0.0, %v1802
        %v1804 = vpop.f32.mrf.mxu0
        %1805 = vmatprep.mubr.f32.mxu0 0.0
        %1806 = vmatmul.mubr.f32.gmra.mxu0 %v1679
        %v1807 = vpop.f32.mrf.mxu0
        %v1808 = vadd.f32 0.0, %v1807
        %v1809 = vpop.f32.mrf.mxu0
        %1810 = vmatprep.mubr.f32.mxu0 0.0
        %1811 = vmatmul.mubr.f32.gmra.mxu0 %v1682
        %v1812 = vpop.f32.mrf.mxu0
        %v1813 = vadd.f32 0.0, %v1812
        %v1814 = vpop.f32.mrf.mxu0
        %1815 = vmatprep.mubr.f32.mxu0 0.0
        %1816 = vmatmul.mubr.f32.gmra.mxu0 %v1685
        %v1817 = vpop.f32.mrf.mxu0
        %v1818 = vadd.f32 0.0, %v1817
        %v1819 = vpop.f32.mrf.mxu0
        %1820 = vmatprep.mubr.f32.mxu0 0.0
        %1821 = vmatmul.mubr.f32.gmra.mxu0 %v1688
        %v1822 = vpop.f32.mrf.mxu0
        %v1823 = vadd.f32 0.0, %v1822
        %v1824 = vpop.f32.mrf.mxu0
        %1825 = vmatprep.mubr.f32.mxu0 0.0
        %1826 = vmatmul.mubr.f32.gmra.mxu0 %v1691
        %v1827 = vpop.f32.mrf.mxu0
        %v1828 = vadd.f32 0.0, %v1827
        %v1829 = vpop.f32.mrf.mxu0
        %1830 = vmatprep.mubr.f32.mxu0 0.0
        %1831 = vmatmul.mubr.f32.gmra.mxu0 %v1694
        %v1832 = vpop.f32.mrf.mxu0
        %v1833 = vadd.f32 0.0, %v1832
        %v1834 = vpop.f32.mrf.mxu0
        %1835 = vmatprep.mubr.f32.mxu0 0.0
        %1836 = vmatmul.mubr.f32.gmra.mxu0 %v1697
        %v1837 = vpop.f32.mrf.mxu0
        %v1838 = vadd.f32 0.0, %v1837
        %v1839 = vpop.f32.mrf.mxu0
        %1840 = vmatprep.mubr.f32.mxu0 0.0
        %1841 = vmatmul.mubr.f32.gmra.mxu0 %v1700
        %v1842 = vpop.f32.mrf.mxu0
        %v1843 = vadd.f32 0.0, %v1842
        %v1844 = vpop.f32.mrf.mxu0
        %1845 = vmatprep.mubr.f32.mxu0 0.0
        %1846 = vmatmul.mubr.f32.gmra.mxu0 %v1703
        %v1847 = vpop.f32.mrf.mxu0
        %v1848 = vadd.f32 0.0, %v1847
        %v1849 = vpop.f32.mrf.mxu0
        %1850 = vmatprep.mubr.f32.mxu0 0.0
        %1851 = vmatmul.mubr.f32.gmra.mxu0 %v1706
        %v1852 = vpop.f32.mrf.mxu0
        %v1853 = vadd.f32 0.0, %v1852
        %v1854 = vpop.f32.mrf.mxu0
        %1855 = vdwg.mxu0
        %v1856 = vsel %vm1195, %v1778, -inf
        %1857 = vmax.xlane.f32.xlu0 %v1856
        %v1858 = vpop.xlane.xlu0 %1857
        %v1859 = vsel %vm1195, %v1783, -inf
        %1860 = vmax.xlane.f32.xlu0 %v1859
        %v1861 = vpop.xlane.xlu0 %1860
        %v1862 = vsel %vm1195, %v1788, -inf
        %1863 = vmax.xlane.f32.xlu0 %v1862
        %v1864 = vpop.xlane.xlu0 %1863
        %v1865 = vsel %vm1195, %v1793, -inf
        %1866 = vmax.xlane.f32.xlu0 %v1865
        %v1867 = vpop.xlane.xlu0 %1866
        %v1868 = vsel %vm1195, %v1798, -inf
        %1869 = vmax.xlane.f32.xlu0 %v1868
        %v1870 = vpop.xlane.xlu0 %1869
        %v1871 = vsel %vm1195, %v1803, -inf
        %1872 = vmax.xlane.f32.xlu0 %v1871
        %v1873 = vpop.xlane.xlu0 %1872
        %v1874 = vsel %vm1195, %v1808, -inf
        %1875 = vmax.xlane.f32.xlu0 %v1874
        %v1876 = vpop.xlane.xlu0 %1875
        %v1877 = vsel %vm1195, %v1813, -inf
        %1878 = vmax.xlane.f32.xlu0 %v1877
        %v1879 = vpop.xlane.xlu0 %1878
        %v1880 = vsel %vm1195, %v1818, -inf
        %1881 = vmax.xlane.f32.xlu0 %v1880
        %v1882 = vpop.xlane.xlu0 %1881
        %v1883 = vsel %vm1195, %v1823, -inf
        %1884 = vmax.xlane.f32.xlu0 %v1883
        %v1885 = vpop.xlane.xlu0 %1884
        %v1886 = vsel %vm1195, %v1828, -inf
        %1887 = vmax.xlane.f32.xlu0 %v1886
        %v1888 = vpop.xlane.xlu0 %1887
        %v1889 = vsel %vm1195, %v1833, -inf
        %1890 = vmax.xlane.f32.xlu0 %v1889
        %v1891 = vpop.xlane.xlu0 %1890
        %v1892 = vsel %vm1195, %v1838, -inf
        %1893 = vmax.xlane.f32.xlu0 %v1892
        %v1894 = vpop.xlane.xlu0 %1893
        %v1895 = vsel %vm1195, %v1843, -inf
        %1896 = vmax.xlane.f32.xlu0 %v1895
        %v1897 = vpop.xlane.xlu0 %1896
        %v1898 = vsel %vm1195, %v1848, -inf
        %1899 = vmax.xlane.f32.xlu0 %v1898
        %v1900 = vpop.xlane.xlu0 %1899
        %v1901 = vsel %vm1195, %v1853, -inf
        %1902 = vmax.xlane.f32.xlu0 %v1901
        %v1903 = vpop.xlane.xlu0 %1902
        %v1904 = vsub.f32 %v1778, %v1858
        %v1905 = vsub.f32 %v1783, %v1861
        %v1906 = vsub.f32 %v1788, %v1864
        %v1907 = vsub.f32 %v1793, %v1867
        %v1908 = vsub.f32 %v1798, %v1870
        %v1909 = vsub.f32 %v1803, %v1873
        %v1910 = vsub.f32 %v1808, %v1876
        %v1911 = vsub.f32 %v1813, %v1879
        %v1912 = vsub.f32 %v1818, %v1882
        %v1913 = vsub.f32 %v1823, %v1885
        %v1914 = vsub.f32 %v1828, %v1888
        %v1915 = vsub.f32 %v1833, %v1891
        %v1916 = vsub.f32 %v1838, %v1894
        %v1917 = vsub.f32 %v1843, %v1897
        %v1918 = vsub.f32 %v1848, %v1900
        %v1919 = vsub.f32 %v1853, %v1903
        %v1920 = vmul.f32 %v1904, 1.442695
        %v1921 = vpow.pop %v1920
        %v1922 = vmul.f32 %v1905, 1.442695
        %v1923 = vpow.pop %v1922
        %v1924 = vmul.f32 %v1906, 1.442695
        %v1925 = vpow.pop %v1924
        %v1926 = vmul.f32 %v1907, 1.442695
        %v1927 = vpow.pop %v1926
        %v1928 = vmul.f32 %v1908, 1.442695
        %v1929 = vpow.pop %v1928
        %v1930 = vmul.f32 %v1909, 1.442695
        %v1931 = vpow.pop %v1930
        %v1932 = vmul.f32 %v1910, 1.442695
        %v1933 = vpow.pop %v1932
        %v1934 = vmul.f32 %v1911, 1.442695
        %v1935 = vpow.pop %v1934
        %v1936 = vmul.f32 %v1912, 1.442695
        %v1937 = vpow.pop %v1936
        %v1938 = vmul.f32 %v1913, 1.442695
        %v1939 = vpow.pop %v1938
        %v1940 = vmul.f32 %v1914, 1.442695
        %v1941 = vpow.pop %v1940
        %v1942 = vmul.f32 %v1915, 1.442695
        %v1943 = vpow.pop %v1942
        %v1944 = vmul.f32 %v1916, 1.442695
        %v1945 = vpow.pop %v1944
        %v1946 = vmul.f32 %v1917, 1.442695
        %v1947 = vpow.pop %v1946
        %v1948 = vmul.f32 %v1918, 1.442695
        %v1949 = vpow.pop %v1948
        %v1950 = vmul.f32 %v1919, 1.442695
        %v1951 = vpow.pop %v1950
        %v1952 = vsel %vm1195, %v1921, 0.0
        %1953 = vadd.xlane.f32.xlu0 %v1952
        %v1954 = vpop.xlane.xlu0 %1953
        %v1955 = vsel %vm1195, %v1923, 0.0
        %1956 = vadd.xlane.f32.xlu0 %v1955
        %v1957 = vpop.xlane.xlu0 %1956
        %v1958 = vsel %vm1195, %v1925, 0.0
        %1959 = vadd.xlane.f32.xlu0 %v1958
        %v1960 = vpop.xlane.xlu0 %1959
        %v1961 = vsel %vm1195, %v1927, 0.0
        %1962 = vadd.xlane.f32.xlu0 %v1961
        %v1963 = vpop.xlane.xlu0 %1962
        %v1964 = vsel %vm1195, %v1929, 0.0
        %1965 = vadd.xlane.f32.xlu0 %v1964
        %v1966 = vpop.xlane.xlu0 %1965
        %v1967 = vsel %vm1195, %v1931, 0.0
        %1968 = vadd.xlane.f32.xlu0 %v1967
        %v1969 = vpop.xlane.xlu0 %1968
        %v1970 = vsel %vm1195, %v1933, 0.0
        %1971 = vadd.xlane.f32.xlu0 %v1970
        %v1972 = vpop.xlane.xlu0 %1971
        %v1973 = vsel %vm1195, %v1935, 0.0
        %1974 = vadd.xlane.f32.xlu0 %v1973
        %v1975 = vpop.xlane.xlu0 %1974
        %v1976 = vsel %vm1195, %v1937, 0.0
        %1977 = vadd.xlane.f32.xlu0 %v1976
        %v1978 = vpop.xlane.xlu0 %1977
        %v1979 = vsel %vm1195, %v1939, 0.0
        %1980 = vadd.xlane.f32.xlu0 %v1979
        %v1981 = vpop.xlane.xlu0 %1980
        %v1982 = vsel %vm1195, %v1941, 0.0
        %1983 = vadd.xlane.f32.xlu0 %v1982
        %v1984 = vpop.xlane.xlu0 %1983
        %v1985 = vsel %vm1195, %v1943, 0.0
        %1986 = vadd.xlane.f32.xlu0 %v1985
        %v1987 = vpop.xlane.xlu0 %1986
        %v1988 = vsel %vm1195, %v1945, 0.0
        %1989 = vadd.xlane.f32.xlu0 %v1988
        %v1990 = vpop.xlane.xlu0 %1989
        %v1991 = vsel %vm1195, %v1947, 0.0
        %1992 = vadd.xlane.f32.xlu0 %v1991
        %v1993 = vpop.xlane.xlu0 %1992
        %v1994 = vsel %vm1195, %v1949, 0.0
        %1995 = vadd.xlane.f32.xlu0 %v1994
        %v1996 = vpop.xlane.xlu0 %1995
        %v1997 = vsel %vm1195, %v1951, 0.0
        %1998 = vadd.xlane.f32.xlu0 %v1997
        %v1999 = vpop.xlane.xlu0 %1998
        %v2000 = vrcp.pop %v1954
        %v2001 = vmul.f32 %v1921, %v2000
        %v2002 = vrcp.pop %v1957
        %v2003 = vmul.f32 %v1923, %v2002
        %v2004 = vrcp.pop %v1960
        %v2005 = vmul.f32 %v1925, %v2004
        %v2006 = vrcp.pop %v1963
        %v2007 = vmul.f32 %v1927, %v2006
        %v2008 = vrcp.pop %v1966
        %v2009 = vmul.f32 %v1929, %v2008
        %v2010 = vrcp.pop %v1969
        %v2011 = vmul.f32 %v1931, %v2010
        %v2012 = vrcp.pop %v1972
        %v2013 = vmul.f32 %v1933, %v2012
        %v2014 = vrcp.pop %v1975
        %v2015 = vmul.f32 %v1935, %v2014
        %v2016 = vrcp.pop %v1978
        %v2017 = vmul.f32 %v1937, %v2016
        %v2018 = vrcp.pop %v1981
        %v2019 = vmul.f32 %v1939, %v2018
        %v2020 = vrcp.pop %v1984
        %v2021 = vmul.f32 %v1941, %v2020
        %v2022 = vrcp.pop %v1987
        %v2023 = vmul.f32 %v1943, %v2022
        %v2024 = vrcp.pop %v1990
        %v2025 = vmul.f32 %v1945, %v2024
        %v2026 = vrcp.pop %v1993
        %v2027 = vmul.f32 %v1947, %v2026
        %v2028 = vrcp.pop %v1996
        %v2029 = vmul.f32 %v1949, %v2028
        %v2030 = vrcp.pop %v1999
        %v2031 = vmul.f32 %v1951, %v2030
        %2032 = vxpose.xlu0.b32.start [1/16] %v2001, 128
        %2033 = vxpose.xlu0.b32.cont [2/16] %v2003, 128
        %2034 = vxpose.xlu0.b32.cont [3/16] %v2005, 128
        %2035 = vxpose.xlu0.b32.cont [4/16] %v2007, 128
        %2036 = vxpose.xlu0.b32.cont [5/16] %v2009, 128
        %2037 = vxpose.xlu0.b32.cont [6/16] %v2011, 128
        %2038 = vxpose.xlu0.b32.cont [7/16] %v2013, 128
        %2039 = vxpose.xlu0.b32.cont [8/16] %v2015, 128
        %2040 = vxpose.xlu0.b32.cont [9/16] %v2017, 128
        %2041 = vxpose.xlu0.b32.cont [10/16] %v2019, 128
        %2042 = vxpose.xlu0.b32.cont [11/16] %v2021, 128
        %2043 = vxpose.xlu0.b32.cont [12/16] %v2023, 128
        %2044 = vxpose.xlu0.b32.cont [13/16] %v2025, 128
        %2045 = vxpose.xlu0.b32.cont [14/16] %v2027, 128
        %2046 = vxpose.xlu0.b32.cont [15/16] %v2029, 128
        %2047 = vxpose.xlu0.b32.end [16/16] %v2031, 128
        %v2048 = vpop.trf.xlu0
        %v2049 = vpop.trf.xlu0
        %v2050 = vpop.trf.xlu0
        %v2051 = vpop.trf.xlu0
        %v2052 = vpop.trf.xlu0
        %v2053 = vpop.trf.xlu0
        %v2054 = vpop.trf.xlu0
        %v2055 = vpop.trf.xlu0
        %v2056 = vpop.trf.xlu0
        %v2057 = vpop.trf.xlu0
        %v2058 = vpop.trf.xlu0
        %v2059 = vpop.trf.xlu0
        %v2060 = vpop.trf.xlu0
        %v2061 = vpop.trf.xlu0
        %v2062 = vpop.trf.xlu0
        %v2063 = vpop.trf.xlu0
        %s2064 = scalar_lea.vmem %s620, 8 [#allocation17]
        %2065 = vst [vmem:[%s2064] sm:$0xff] %v2048
        %v2067 = vsel %vm1195, %v2001, 0
        %v2070 = vsel %vm1195, %v2003, 0
        %v2073 = vsel %vm1195, %v2005, 0
        %v2076 = vsel %vm1195, %v2007, 0
        %v2079 = vsel %vm1195, %v2009, 0
        %v2082 = vsel %vm1195, %v2011, 0
        %v2085 = vsel %vm1195, %v2013, 0
        %v2088 = vsel %vm1195, %v2015, 0
        %v2091 = vsel %vm1195, %v2017, 0
        %v2094 = vsel %vm1195, %v2019, 0
        %v2097 = vsel %vm1195, %v2021, 0
        %v2100 = vsel %vm1195, %v2023, 0
        %v2103 = vsel %vm1195, %v2025, 0
        %v2106 = vsel %vm1195, %v2027, 0
        %v2109 = vsel %vm1195, %v2029, 0
        %v2112 = vsel %vm1195, %v2031, 0
        %2114 = vmatprep.subr.mxu0 0.0
        %2115 = vmatpush1.msra.mxu0 0.0
        %2116 = vmatprep.subr.mxu0 0.0
        %2117 = vmatpush1.msra.mxu0 0.0
        %2118 = vmatprep.subr.mxu0 0.0
        %2119 = vmatpush1.msra.mxu0 0.0
        %2120 = vmatprep.subr.mxu0 0.0
        %2121 = vmatpush1.msra.mxu0 0.0
        %2122 = vmatprep.subr.mxu0 0.0
        %2123 = vmatpush1.msra.mxu0 0.0
        %2124 = vmatprep.subr.mxu0 0.0
        %2125 = vmatpush1.msra.mxu0 0.0
        %2126 = vmatprep.subr.mxu0 0.0
        %2127 = vmatpush1.msra.mxu0 0.0
        %2128 = vmatprep.subr.mxu0 0.0
        %2129 = vmatpush1.msra.mxu0 0.0
        %2130 = vmatprep.subr.mxu0 0.0
        %2131 = vmatpush1.msra.mxu0 0.0
        %2132 = vmatprep.subr.mxu0 0.0
        %2133 = vmatpush1.msra.mxu0 0.0
        %2134 = vmatprep.subr.mxu0 0.0
        %2135 = vmatpush1.msra.mxu0 0.0
        %2136 = vmatprep.subr.mxu0 0.0
        %2137 = vmatpush1.msra.mxu0 0.0
        %2138 = vmatprep.subr.mxu0 0.0
        %2139 = vmatpush1.msra.mxu0 0.0
        %2140 = vmatprep.subr.mxu0 0.0
        %2141 = vmatpush1.msra.mxu0 0.0
        %2142 = vmatprep.subr.mxu0 0.0
        %2143 = vmatpush1.msra.mxu0 0.0
        %2144 = vmatprep.subr.mxu0 0.0
        %2145 = vmatpush1.msra.mxu0 %v924
        %2146 = vmatprep.subr.mxu0 0.0
        %2147 = vmatpush2.msra.mxu0 0.0
        %2148 = vmatprep.subr.mxu0 0.0
        %2149 = vmatpush2.msra.mxu0 0.0
        %2150 = vmatprep.subr.mxu0 0.0
        %2151 = vmatpush2.msra.mxu0 0.0
        %2152 = vmatprep.subr.mxu0 0.0
        %2153 = vmatpush2.msra.mxu0 0.0
        %2154 = vmatprep.subr.mxu0 0.0
        %2155 = vmatpush2.msra.mxu0 0.0
        %2156 = vmatprep.subr.mxu0 0.0
        %2157 = vmatpush2.msra.mxu0 0.0
        %2158 = vmatprep.subr.mxu0 0.0
        %2159 = vmatpush2.msra.mxu0 0.0
        %2160 = vmatprep.subr.mxu0 0.0
        %2161 = vmatpush2.msra.mxu0 0.0
        %2162 = vmatprep.subr.mxu0 0.0
        %2163 = vmatpush2.msra.mxu0 0.0
        %2164 = vmatprep.subr.mxu0 0.0
        %2165 = vmatpush2.msra.mxu0 0.0
        %2166 = vmatprep.subr.mxu0 0.0
        %2167 = vmatpush2.msra.mxu0 0.0
        %2168 = vmatprep.subr.mxu0 0.0
        %2169 = vmatpush2.msra.mxu0 0.0
        %2170 = vmatprep.subr.mxu0 0.0
        %2171 = vmatpush2.msra.mxu0 0.0
        %2172 = vmatprep.subr.mxu0 0.0
        %2173 = vmatpush2.msra.mxu0 0.0
        %2174 = vmatprep.subr.mxu0 0.0
        %2175 = vmatpush2.msra.mxu0 0.0
        %2176 = vmatprep.subr.mxu0 0.0
        %2177 = vmatpush2.msra.mxu0 0.0
        %2178 = vmatprep.mubr.f32.mxu0 0.0
        %2179 = vmatmul.mubr.f32.gmra.mxu0 %v2067
        %v2180 = vpop.f32.mrf.mxu0
        %v2181 = vadd.f32 0.0, %v2180
        %v2182 = vpop.f32.mrf.mxu0
        %2183 = vmatprep.mubr.f32.mxu0 0.0
        %2184 = vmatmul.mubr.f32.gmra.mxu0 %v2070
        %v2185 = vpop.f32.mrf.mxu0
        %v2186 = vadd.f32 0.0, %v2185
        %v2187 = vpop.f32.mrf.mxu0
        %2188 = vmatprep.mubr.f32.mxu0 0.0
        %2189 = vmatmul.mubr.f32.gmra.mxu0 %v2073
        %v2190 = vpop.f32.mrf.mxu0
        %v2191 = vadd.f32 0.0, %v2190
        %v2192 = vpop.f32.mrf.mxu0
        %2193 = vmatprep.mubr.f32.mxu0 0.0
        %2194 = vmatmul.mubr.f32.gmra.mxu0 %v2076
        %v2195 = vpop.f32.mrf.mxu0
        %v2196 = vadd.f32 0.0, %v2195
        %v2197 = vpop.f32.mrf.mxu0
        %2198 = vmatprep.mubr.f32.mxu0 0.0
        %2199 = vmatmul.mubr.f32.gmra.mxu0 %v2079
        %v2200 = vpop.f32.mrf.mxu0
        %v2201 = vadd.f32 0.0, %v2200
        %v2202 = vpop.f32.mrf.mxu0
        %2203 = vmatprep.mubr.f32.mxu0 0.0
        %2204 = vmatmul.mubr.f32.gmra.mxu0 %v2082
        %v2205 = vpop.f32.mrf.mxu0
        %v2206 = vadd.f32 0.0, %v2205
        %v2207 = vpop.f32.mrf.mxu0
        %2208 = vmatprep.mubr.f32.mxu0 0.0
        %2209 = vmatmul.mubr.f32.gmra.mxu0 %v2085
        %v2210 = vpop.f32.mrf.mxu0
        %v2211 = vadd.f32 0.0, %v2210
        %v2212 = vpop.f32.mrf.mxu0
        %2213 = vmatprep.mubr.f32.mxu0 0.0
        %2214 = vmatmul.mubr.f32.gmra.mxu0 %v2088
        %v2215 = vpop.f32.mrf.mxu0
        %v2216 = vadd.f32 0.0, %v2215
        %v2217 = vpop.f32.mrf.mxu0
        %2218 = vmatprep.mubr.f32.mxu0 0.0
        %2219 = vmatmul.mubr.f32.gmra.mxu0 %v2091
        %v2220 = vpop.f32.mrf.mxu0
        %v2221 = vadd.f32 0.0, %v2220
        %v2222 = vpop.f32.mrf.mxu0
        %2223 = vmatprep.mubr.f32.mxu0 0.0
        %2224 = vmatmul.mubr.f32.gmra.mxu0 %v2094
        %v2225 = vpop.f32.mrf.mxu0
        %v2226 = vadd.f32 0.0, %v2225
        %v2227 = vpop.f32.mrf.mxu0
        %2228 = vmatprep.mubr.f32.mxu0 0.0
        %2229 = vmatmul.mubr.f32.gmra.mxu0 %v2097
        %v2230 = vpop.f32.mrf.mxu0
        %v2231 = vadd.f32 0.0, %v2230
        %v2232 = vpop.f32.mrf.mxu0
        %2233 = vmatprep.mubr.f32.mxu0 0.0
        %2234 = vmatmul.mubr.f32.gmra.mxu0 %v2100
        %v2235 = vpop.f32.mrf.mxu0
        %v2236 = vadd.f32 0.0, %v2235
        %v2237 = vpop.f32.mrf.mxu0
        %2238 = vmatprep.mubr.f32.mxu0 0.0
        %2239 = vmatmul.mubr.f32.gmra.mxu0 %v2103
        %v2240 = vpop.f32.mrf.mxu0
        %v2241 = vadd.f32 0.0, %v2240
        %v2242 = vpop.f32.mrf.mxu0
        %2243 = vmatprep.mubr.f32.mxu0 0.0
        %2244 = vmatmul.mubr.f32.gmra.mxu0 %v2106
        %v2245 = vpop.f32.mrf.mxu0
        %v2246 = vadd.f32 0.0, %v2245
        %v2247 = vpop.f32.mrf.mxu0
        %2248 = vmatprep.mubr.f32.mxu0 0.0
        %2249 = vmatmul.mubr.f32.gmra.mxu0 %v2109
        %v2250 = vpop.f32.mrf.mxu0
        %v2251 = vadd.f32 0.0, %v2250
        %v2252 = vpop.f32.mrf.mxu0
        %2253 = vmatprep.mubr.f32.mxu0 0.0
        %2254 = vmatmul.mubr.f32.gmra.mxu0 %v2112
        %v2255 = vpop.f32.mrf.mxu0
        %v2256 = vadd.f32 0.0, %v2255
        %v2257 = vpop.f32.mrf.mxu0
        %2258 = vdwg.mxu0
        %v2259 = vmul.f32 %v2181, %v946
        %v2260 = vmul.f32 %v2186, %v946
        %v2261 = vmul.f32 %v2191, %v950
        %v2262 = vmul.f32 %v2196, %v950
        %v2263 = vmul.f32 %v2201, %v954
        %v2264 = vmul.f32 %v2206, %v954
        %v2265 = vmul.f32 %v2211, %v958
        %v2266 = vmul.f32 %v2216, %v958
        %v2267 = vmul.f32 %v2221, %v962
        %v2268 = vmul.f32 %v2226, %v962
        %v2269 = vmul.f32 %v2231, %v966
        %v2270 = vmul.f32 %v2236, %v966
        %v2271 = vmul.f32 %v2241, %v970
        %v2272 = vmul.f32 %v2246, %v970
        %v2273 = vmul.f32 %v2251, %v974
        %v2274 = vmul.f32 %v2256, %v974
        %v2275 = vsel %vm645, %v2259, 0.0
        %v2276 = vsel %vm645, %v2261, 0.0
        %v2277 = vadd.f32 %v2275, %v2276
        %v2278 = vsel %vm645, %v2263, 0.0
        %v2279 = vadd.f32 %v2277, %v2278
        %v2280 = vsel %vm645, %v2265, 0.0
        %v2281 = vadd.f32 %v2279, %v2280
        %v2282 = vsel %vm645, %v2267, 0.0
        %v2283 = vadd.f32 %v2281, %v2282
        %v2284 = vsel %vm645, %v2269, 0.0
        %v2285 = vadd.f32 %v2283, %v2284
        %v2286 = vsel %vm645, %v2271, 0.0
        %v2287 = vadd.f32 %v2285, %v2286
        %v2288 = vsel %vm645, %v2273, 0.0
        %v2289 = vadd.f32 %v2287, %v2288
        %v2290 = vsel %vm645, %v2260, 0.0
        %v2291 = vsel %vm645, %v2262, 0.0
        %v2292 = vadd.f32 %v2290, %v2291
        %v2293 = vsel %vm645, %v2264, 0.0
        %v2294 = vadd.f32 %v2292, %v2293
        %v2295 = vsel %vm645, %v2266, 0.0
        %v2296 = vadd.f32 %v2294, %v2295
        %v2297 = vsel %vm645, %v2268, 0.0
        %v2298 = vadd.f32 %v2296, %v2297
        %v2299 = vsel %vm645, %v2270, 0.0
        %v2300 = vadd.f32 %v2298, %v2299
        %v2301 = vsel %vm645, %v2272, 0.0
        %v2302 = vadd.f32 %v2300, %v2301
        %v2303 = vsel %vm645, %v2274, 0.0
        %v2304 = vadd.f32 %v2302, %v2303
        %v2305 = vld [vmem:[#allocation14] sm:$0xff]
        %v2306 = vld [vmem:[#allocation14 + $0x8] sm:$0xff]
        %v2307 = vld [vmem:[#allocation14 + $0x10] sm:$0xff]
        %v2308 = vld [vmem:[#allocation14 + $0x18] sm:$0xff]
        %v2309 = vld [vmem:[%s11] sm:$0x1]
        %v2311 = vlaneseq
        %v2312 = vshrl.u32 %v2311, 7
        %v2313 = vsub.s32 0, %v2312
        %v2314 = vrot.slane %v2309, %v2313
        %v2317 = vsel %vm645, %v1628, 0
        %v2320 = vsel %vm645, %v1643, 0
        %v2323 = vsel %vm645, %v2289, 0
        %v2326 = vsel %vm645, %v2304, 0
        %2328 = vmatprep.subr.mxu0 0.0
        %2329 = vmatpush1.msra.mxu0 0.0
        %2330 = vmatprep.subr.mxu0 0.0
        %2331 = vmatpush1.msra.mxu0 0.0
        %2332 = vmatprep.subr.mxu0 0.0
        %2333 = vmatpush1.msra.mxu0 0.0
        %2334 = vmatprep.subr.mxu0 0.0
        %2335 = vmatpush1.msra.mxu0 0.0
        %2336 = vmatprep.subr.mxu0 0.0
        %2337 = vmatpush1.msra.mxu0 0.0
        %2338 = vmatprep.subr.mxu0 0.0
        %2339 = vmatpush1.msra.mxu0 0.0
        %2340 = vmatprep.subr.mxu0 0.0
        %2341 = vmatpush1.msra.mxu0 0.0
        %2342 = vmatprep.subr.mxu0 0.0
        %2343 = vmatpush1.msra.mxu0 0.0
        %2344 = vmatprep.subr.mxu0 0.0
        %2345 = vmatpush1.msra.mxu0 0.0
        %2346 = vmatprep.subr.mxu0 0.0
        %2347 = vmatpush1.msra.mxu0 0.0
        %2348 = vmatprep.subr.mxu0 0.0
        %2349 = vmatpush1.msra.mxu0 0.0
        %2350 = vmatprep.subr.mxu0 0.0
        %2351 = vmatpush1.msra.mxu0 0.0
        %2352 = vmatprep.subr.mxu0 0.0
        %2353 = vmatpush1.msra.mxu0 %v2308
        %2354 = vmatprep.subr.mxu0 0.0
        %2355 = vmatpush1.msra.mxu0 %v2307
        %2356 = vmatprep.subr.mxu0 0.0
        %2357 = vmatpush1.msra.mxu0 %v2306
        %2358 = vmatprep.subr.mxu0 0.0
        %2359 = vmatpush1.msra.mxu0 %v2305
        %2360 = vmatprep.subr.mxu0 0.0
        %2361 = vmatpush2.msra.mxu0 0.0
        %2362 = vmatprep.subr.mxu0 0.0
        %2363 = vmatpush2.msra.mxu0 0.0
        %2364 = vmatprep.subr.mxu0 0.0
        %2365 = vmatpush2.msra.mxu0 0.0
        %2366 = vmatprep.subr.mxu0 0.0
        %2367 = vmatpush2.msra.mxu0 0.0
        %2368 = vmatprep.subr.mxu0 0.0
        %2369 = vmatpush2.msra.mxu0 0.0
        %2370 = vmatprep.subr.mxu0 0.0
        %2371 = vmatpush2.msra.mxu0 0.0
        %2372 = vmatprep.subr.mxu0 0.0
        %2373 = vmatpush2.msra.mxu0 0.0
        %2374 = vmatprep.subr.mxu0 0.0
        %2375 = vmatpush2.msra.mxu0 0.0
        %2376 = vmatprep.subr.mxu0 0.0
        %2377 = vmatpush2.msra.mxu0 0.0
        %2378 = vmatprep.subr.mxu0 0.0
        %2379 = vmatpush2.msra.mxu0 0.0
        %2380 = vmatprep.subr.mxu0 0.0
        %2381 = vmatpush2.msra.mxu0 0.0
        %2382 = vmatprep.subr.mxu0 0.0
        %2383 = vmatpush2.msra.mxu0 0.0
        %2384 = vmatprep.subr.mxu0 0.0
        %2385 = vmatpush2.msra.mxu0 0.0
        %2386 = vmatprep.subr.mxu0 0.0
        %2387 = vmatpush2.msra.mxu0 0.0
        %2388 = vmatprep.subr.mxu0 0.0
        %2389 = vmatpush2.msra.mxu0 0.0
        %2390 = vmatprep.subr.mxu0 0.0
        %2391 = vmatpush2.msra.mxu0 0.0
        %2392 = vmatprep.mubr.f32.mxu0 0.0
        %2393 = vmatmul.mubr.f32.gmra.mxu0 %v2317
        %v2394 = vpop.f32.mrf.mxu0
        %v2395 = vadd.f32 %v2314, %v2394
        %v2396 = vpop.f32.mrf.mxu0
        %2397 = vmatprep.mubr.f32.mxu0 0.0
        %2398 = vmatmul.mubr.f32.gmra.mxu0 %v2320
        %v2399 = vpop.f32.mrf.mxu0
        %v2400 = vadd.f32 %v2314, %v2399
        %v2401 = vpop.f32.mrf.mxu0
        %2402 = vmatprep.mubr.f32.mxu0 0.0
        %2403 = vmatmul.mubr.f32.gmra.mxu0 %v2323
        %v2404 = vpop.f32.mrf.mxu0
        %v2405 = vadd.f32 %v2314, %v2404
        %v2406 = vpop.f32.mrf.mxu0
        %2407 = vmatprep.mubr.f32.mxu0 0.0
        %2408 = vmatmul.mubr.f32.gmra.mxu0 %v2326
        %v2409 = vpop.f32.mrf.mxu0
        %v2410 = vadd.f32 %v2314, %v2409
        %v2411 = vpop.f32.mrf.mxu0
        %2412 = vdwg.mxu0
        %2413 = vst.msk [vmem:[%s613] sm:$0xff] %vm645, %v2395
        %2414 = vst.msk [vmem:[%s613 + $0x8] sm:$0xff] %vm645, %v2400
        %2415 = vst.msk [vmem:[%s613 + $0x10] sm:$0xff] %vm645, %v2405
        %2416 = vst.msk [vmem:[%s613 + $0x18] sm:$0xff] %vm645, %v2410
        %s2417 = sand.u32 %s315, 1
        %s2418 = scalar_lea.sflag [#allocation4], %s2417
        %s2419 = sand.u32 %s315, 1
        %s2420 = smul.addr %s2419, 32
        %s2421 = scalar_lea.vmem [#allocation16], %s2420
        %s2422 = sand.u32 %s341, 1
        %s2423 = scalar_lea.sflag [#allocation18], %s2422
        %s2424 = sand.u32 %s341, 1
        %s2425 = smul.addr %s2424, 16
        %s2426 = scalar_lea.vmem [#allocation17], %s2425
        // Predicated region
        $region101: #{tpu_custom_call.1} parent=67 // pred_check
          %p2427 = pneg %p325
        $region102: #{tpu_custom_call.1} parent=67 // pred_check_branch
          %2429 = sbr.rel (%p2427) target = $region104
        $region103: #{tpu_custom_call.1} parent=67 // pred_region
          %s2430 = smul.u32 2, %s40
          %s2432 = ssub.s32 512, 512
          %2433 = vsyncadd %s2418, %s2432
          %s2434 = smul.addr %s2430, 2
          %s2435 = smul.addr %s2434, 128
          %s2436 = scalar_lea.hbm %s12, %s2435
          %s2437 = sshll.u32 %s2421, 4
          %s2438 = int_to_ptr.vmem [resolvable:$true] %s2437
          %2443 = dma.vmem_to_hbm [thread:$0]  %s2438, 512, %s2436, %s2418, 128, 128, 8
        $region104: #{tpu_custom_call.1} parent=67 // pred_fallthru
          _
        // Predicated region
        $region105: #{tpu_custom_call.1} parent=67 // pred_check
          %p2444 = pneg %p351
        $region106: #{tpu_custom_call.1} parent=67 // pred_check_branch
          %2446 = sbr.rel (%p2444) target = $region108
        $region107: #{tpu_custom_call.1} parent=67 // pred_region
          %s2447 = smul.u32 2, %s40
          %s2449 = ssub.s32 256, 256
          %2450 = vsyncadd %s2423, %s2449
          %s2451 = smul.addr %s2447, 128
          %s2452 = scalar_lea.hbm %s13, %s2451
          %s2453 = sshll.u32 %s2426, 4
          %s2454 = int_to_ptr.vmem [resolvable:$true] %s2453
          %2459 = dma.vmem_to_hbm [thread:$0]  %s2454, 256, %s2452, %s2423, 128, 128, 8
        $region108: #{tpu_custom_call.1} parent=67 // pred_fallthru
          _
      $region68: #{tpu_custom_call.1} parent=5 // pred_fallthru
        _
      %p2460 = scmp.le.s32.totalorder 2, %s35
      // Predicated region
      $region109: #{tpu_custom_call.1} parent=5 // pred_check
        %p2461 = pneg %p2460
      $region110: #{tpu_custom_call.1} parent=5 // pred_check_branch
        %2463 = sbr.rel (%p2461) target = $region112
      $region111: #{tpu_custom_call.1} parent=5 // pred_region
        %s2464 = ssub.s32 %s35, 2
        // Predicated region
        $region113: #{tpu_custom_call.1} parent=111 // pred_check
          %p2465 = pneg %p331
        $region114: #{tpu_custom_call.1} parent=111 // pred_check_branch
          %2467 = sbr.rel (%p2465) target = $region116
        $region115: #{tpu_custom_call.1} parent=111 // pred_region
          %s2468 = sand.u32 %s316, 1
          %s2469 = scalar_lea.sflag [#allocation4], %s2468
          %s2470 = sand.u32 %s316, 1
          %s2471 = smul.addr %s2470, 32
          %s2472 = scalar_lea.vmem [#allocation16], %s2471
          %2473 = dma.done %s2469, 512
        $region116: #{tpu_custom_call.1} parent=111 // pred_fallthru
          _
        // Predicated region
        $region117: #{tpu_custom_call.1} parent=111 // pred_check
          %p2474 = pneg %p357
        $region118: #{tpu_custom_call.1} parent=111 // pred_check_branch
          %2476 = sbr.rel (%p2474) target = $region120
        $region119: #{tpu_custom_call.1} parent=111 // pred_region
          %s2477 = sand.u32 %s342, 1
          %s2478 = scalar_lea.sflag [#allocation18], %s2477
          %s2479 = sand.u32 %s342, 1
          %s2480 = smul.addr %s2479, 16
          %s2481 = scalar_lea.vmem [#allocation17], %s2480
          %2482 = dma.done %s2478, 256
        $region120: #{tpu_custom_call.1} parent=111 // pred_fallthru
          _
      $region112: #{tpu_custom_call.1} parent=5 // pred_fallthru
        _
    $region6: #{tpu_custom_call.1} parent=1 // loop_footer
      %s39 = sadd.s32 1, %s35
    $region7: #{tpu_custom_call.1} parent=1 // loop_footer_branch
      %34 = sbr.rel target = $region3
    $region8: #{tpu_custom_call.1} parent=1 // loop_exit
      _
    %2483 = vsyncpa [#allocation3], 1
    %s2484 = scalar_lea.sflag [#allocation3], 1
    %2485 = vsyncpa %s2484, 1
    %2486 = vsyncpa [#allocation6], 1
    %s2487 = scalar_lea.sflag [#allocation6], 1
    %2488 = vsyncpa %s2487, 1
    %2489 = vsyncpa [#allocation9], 1
    %2490 = vsyncpa [#allocation12], 1
    %2491 = vsyncpa [#allocation15], 1
    %2492 = vsyncpa [#allocation4], 1
    %s2493 = scalar_lea.sflag [#allocation4], 1
    %2494 = vsyncpa %s2493, 1
    %2495 = vsyncpa [#allocation18], 1
    %s2496 = scalar_lea.sflag [#allocation18], 1
    %2497 = vsyncpa %s2496, 1

</llo_original>
